<compile_context>
chip_gen: v5e
topology: v5e:2x2
jax: 0.10.0
libtpu: 0.0.40
codegen_flags: <defaults>
</compile_context>

<pallas_src>
import functools

import jax
import jax.numpy as jnp
from jax.experimental import pallas as pl
from jax.experimental.pallas import tpu as pltpu

EPSILON = 1e-10
INIT_RANGE = 0.5
# Multiply up to this many relu(z)+EPS terms (each >= 1e-10) before taking one log.
# 3 terms -> product >= 1e-30 which is still a normal f32 (no denormal flush).
_LOG_GROUP = 3


def _log_product(z, axis):
    """-1 / (-1 + sum(log(relu(z) + eps), axis)) — matches torch Product.forward."""
    return -1.0 / (-1.0 + jnp.sum(jnp.log(jnp.maximum(z, 0.0) + EPSILON), axis=axis))


def _round_up(v, m):
    return ((v + m - 1) // m) * m


# --------------------------------------------------------------------------- #
# Kernel
# --------------------------------------------------------------------------- #
def _union_kernel(x_ref, base_ref, coef_ref, alpha_ref, beta_ref, out_ref, *,
                  input_dim, group):
    """One (tb, tn) output tile of the unified con|dis rule layer.

    x_ref:     (tb, D)   inputs
    base_ref:  (D, tn)   affine offset  (con: 1-Wc^T, dis: 1)
    coef_ref:  (D, tn)   affine slope   (con: Wc^T,  dis: -Wd^T)
    alpha_ref: (1, tn)   output offset  (con: 0, dis: 1)
    beta_ref:  (1, tn)   output scale   (con: A, dis: -1)
    out_ref:   (tb, tn)
    """
    tb = out_ref.shape[0]
    tn = out_ref.shape[1]

    # Streamed log-sum over the feature axis D: no (tb, D, tn) temporaries.
    s = jnp.zeros((tb, tn), jnp.float32)
    d0 = 0
    while d0 < input_dim:                      # static Python loop (unrolled at trace)
        g = min(group, input_dim - d0)
        p = None
        for di in range(d0, d0 + g):
            xd = x_ref[:, pl.ds(di, 1)]        # (tb, 1)  lane-broadcast over rules
            bd = base_ref[pl.ds(di, 1), :]     # (1, tn)  sublane-broadcast over batch
            cd = coef_ref[pl.ds(di, 1), :]     # (1, tn)
            z = jnp.maximum(bd + xd * cd, 0.0) + EPSILON   # relu(z)+eps, (tb, tn)
            p = z if p is None else p * z      # VPU product of <= `group` terms
        s = s + jnp.log(p)                     # one EUP log per group
        d0 += g

    prod = -pl.reciprocal(s - 1.0, approx=False)          # == -1 / (-1 + s)
    out_ref[...] = (alpha_ref[...] + beta_ref[...] * prod).astype(out_ref.dtype)


# --------------------------------------------------------------------------- #
# Tiling heuristics
# --------------------------------------------------------------------------- #
def _choose_tiles(batch, input_dim, n_cols, vmem_budget_bytes):
    """n_cols = 2*Npad (multiple of 256). Returns (tb, tn)."""
    npad = n_cols // 2
    # Lane-dense rule tile; tn <= Npad keeps >= 2 steps on the (parallel) rule axis,
    # so both v7x TensorCores always get work.
    tn = 128
    while tn * 2 <= min(npad, 512) and n_cols % (tn * 2) == 0:
        tn *= 2

    def est(tb):
        # double-buffered I/O blocks + a small number of live (tb, tn) f32 temporaries
        io = 2 * (tb * input_dim + 2 * input_dim * tn + 2 * 8 * tn + tb * tn) * 4
        scratch = 6 * tb * tn * 4
        return io + scratch

    tb = 8
    while tb * 2 <= 2048 and est(tb * 2) <= vmem_budget_bytes:
        tb *= 2
    tb = min(tb, _round_up(batch, 8))          # do not over-pad tiny batches
    tb = max(8, (tb // 8) * 8)
    return tb, tn


# --------------------------------------------------------------------------- #
# Wrapper
# --------------------------------------------------------------------------- #
def union_layer_forward(x, w_con, w_dis):
    """Pallas forward of UnionLayer (use_not=False, interlaced=False).

    Args:
      x:     (B, D) float inputs in [0, 1]
      w_con: (N, D) conjunction weights
      w_dis: (N, D) disjunction weights
    Returns:
      (B, 2*N) float32: [:, :N] conjunction nodes, [:, N:] disjunction nodes.
    """
    B, D = x.shape
    N, D2 = w_con.shape
    assert D == D2 and w_dis.shape == (N, D)

    x = x.astype(jnp.float32)
    w_con = w_con.astype(jnp.float32)
    w_dis = w_dis.astype(jnp.float32)

    # Generation-aware VMEM sizing (fallback: v7x's 64 MiB per-TC ceiling).
    try:
        vmem_cap = int(pltpu.get_tpu_info().vmem_capacity_bytes)
    except Exception:  # pragma: no cover - conservative fallback
        vmem_cap = 64 * 1024 * 1024
    vmem_budget = vmem_cap // 3
    vmem_limit = min((vmem_cap * 3) // 4, 112 * 1024 * 1024)

    n_pad = _round_up(N, 128)
    pad_n = n_pad - N

    wc_t = w_con.T                                               # (D, N)
    wd_t = w_dis.T                                               # (D, N)
    # Hoisted A[j] = 1 - Product_d(1 - Wc[j, d]); folded into beta below.
    a_vec = 1.0 - _log_product(1.0 - w_con, axis=1)              # (N,)

    # Unified affine form (padded columns: base=1, coef=0 -> z=1 -> harmless; sliced off).
    base = jnp.concatenate(
        [jnp.pad(1.0 - wc_t, ((0, 0), (0, pad_n)), constant_values=1.0),
         jnp.ones((D, n_pad), jnp.float32)], axis=1)             # (D, 2*Npad)
    coef = jnp.concatenate(
        [jnp.pad(wc_t, ((0, 0), (0, pad_n))),
         jnp.pad(-wd_t, ((0, 0), (0, pad_n)))], axis=1)          # (D, 2*Npad)
    alpha = jnp.concatenate(
        [jnp.zeros((n_pad,), jnp.float32),
         jnp.ones((n_pad,), jnp.float32)]).reshape(1, 2 * n_pad)  # (1, 2*Npad)
    beta = jnp.concatenate(
        [jnp.pad(a_vec, (0, pad_n)),
         -jnp.ones((n_pad,), jnp.float32)]).reshape(1, 2 * n_pad)  # (1, 2*Npad)

    tb, tn = _choose_tiles(B, D, 2 * n_pad, vmem_budget)
    b_pad = _round_up(B, tb)
    if b_pad != B:
        # Zero padding is numerically safe here: z stays >= 0 for padded rows.
        x = jnp.pad(x, ((0, b_pad - B), (0, 0)))

    grid = (b_pad // tb, (2 * n_pad) // tn)
    kernel = functools.partial(_union_kernel, input_dim=D, group=_LOG_GROUP)

    out = pl.pallas_call(
        kernel,
        out_shape=jax.ShapeDtypeStruct((b_pad, 2 * n_pad), jnp.float32),
        grid_spec=pltpu.PrefetchScalarGridSpec(
            num_scalar_prefetch=0,
            grid=grid,
            in_specs=[
                pl.BlockSpec((tb, D), lambda i, j: (i, 0)),   # x tile (reused over j)
                pl.BlockSpec((D, tn), lambda i, j: (0, j)),   # base tile
                pl.BlockSpec((D, tn), lambda i, j: (0, j)),   # coef tile
                pl.BlockSpec((1, tn), lambda i, j: (0, j)),   # alpha tile
                pl.BlockSpec((1, tn), lambda i, j: (0, j)),   # beta tile
            ],
            out_specs=pl.BlockSpec((tb, tn), lambda i, j: (i, j)),
        ),
        compiler_params=pltpu.CompilerParams(
            dimension_semantics=("parallel", "parallel"),
            vmem_limit_bytes=vmem_limit,
        ),
    )(x, base, coef, alpha, beta)

    if pad_n == 0:
        # Both branches already live contiguously in the kernel output; no concat.
        return out[:B] if b_pad != B else out
    return jnp.concatenate([out[:B, :N], out[:B, n_pad:n_pad + N]], axis=1)


# --------------------------------------------------------------------------- #
# Pure-JAX reference (matches the PyTorch forward exactly)
# --------------------------------------------------------------------------- #
def union_layer_reference(x, w_con, w_dis):
    a = 1.0 - _log_product(1.0 - w_con, axis=1)                          # (N,)
    z_con = 1.0 - (1.0 - x)[:, :, None] * w_con.T[None, :, :]            # (B, D, N)
    out_con = _log_product(z_con, axis=1) * a[None, :]                   # (B, N)
    z_dis = 1.0 - x[:, :, None] * w_dis.T[None, :, :]                    # (B, D, N)
    out_dis = 1.0 - _log_product(z_dis, axis=1)                          # (B, N)
    return jnp.concatenate([out_con, out_dis], axis=1)


if __name__ == "__main__":
    # Small shapes consistent with the module: batch=8, input_dim=32, n=16.
    B, D, N = 8, 32, 16

    key = jax.random.PRNGKey(0)
    kx, kc, kd = jax.random.split(key, 3)

    # Inputs lie in [0, 1] (rule-based representation).
    x = jax.random.uniform(kx, (B, D), dtype=jnp.float32)
    # Parameter init mirroring W = INIT_RANGE * rand(n, input_dim).
    w_con = INIT_RANGE * jax.random.uniform(kc, (N, D), dtype=jnp.float32)
    w_dis = INIT_RANGE * jax.random.uniform(kd, (N, D), dtype=jnp.float32)

    out = union_layer_forward(x, w_con, w_dis)
    out = jax.block_until_ready(out)

    ref = union_layer_reference(x, w_con, w_dis)
    assert out.shape == (B, 2 * N), out.shape
    assert jnp.allclose(out, ref, atol=3e-5, rtol=1e-5), float(
        jnp.max(jnp.abs(out - ref))
    )

    print("KERNEL_OK")
</pallas_src>

<mosaic_0001>
module attributes {stable_mosaic.version = 11 : i64} {
  func.func @_union_kernel(%arg0: i32, %arg1: i32, %arg2: memref<8x32xf32, #tpu.memory_space<vmem>>, %arg3: memref<32x128xf32, #tpu.memory_space<vmem>>, %arg4: memref<32x128xf32, #tpu.memory_space<vmem>>, %arg5: memref<1x128xf32, #tpu.memory_space<vmem>>, %arg6: memref<1x128xf32, #tpu.memory_space<vmem>>, %arg7: memref<8x128xf32, #tpu.memory_space<vmem>>) attributes {dimension_semantics = [#tpu.dimension_semantics<parallel>, #tpu.dimension_semantics<parallel>], iteration_bounds = array<i64: 1, 2>, scalar_prefetch = 0 : i64, scratch_operands = 0 : i64, tpu.core_type = #tpu.core_type<tc>, window_params = [{transform_indices = @transform_0, window_bounds = array<i64: 8, 32>}, {transform_indices = @transform_1, window_bounds = array<i64: 32, 128>}, {transform_indices = @transform_2, window_bounds = array<i64: 32, 128>}, {transform_indices = @transform_3, window_bounds = array<i64: 1, 128>}, {transform_indices = @transform_4, window_bounds = array<i64: 1, 128>}, {transform_indices = @transform_5, window_bounds = array<i64: 8, 128>}]} {
    %cst = arith.constant 0.000000e+00 : f32
    %0 = vector.broadcast %cst : f32 to vector<8x128xf32>
    %c0 = arith.constant 0 : index
    %c0_0 = arith.constant 0 : index
    %1 = vector.load %arg2[%c0, %c0_0] : memref<8x32xf32, #tpu.memory_space<vmem>>, vector<8x1xf32>
    %c0_1 = arith.constant 0 : index
    %c0_2 = arith.constant 0 : index
    %2 = vector.load %arg3[%c0_1, %c0_2] : memref<32x128xf32, #tpu.memory_space<vmem>>, vector<1x128xf32>
    %c0_3 = arith.constant 0 : index
    %c0_4 = arith.constant 0 : index
    %3 = vector.load %arg4[%c0_3, %c0_4] : memref<32x128xf32, #tpu.memory_space<vmem>>, vector<1x128xf32>
    %4 = vector.broadcast %1 : vector<8x1xf32> to vector<8x128xf32>
    %5 = vector.broadcast %3 : vector<1x128xf32> to vector<8x128xf32>
    %6 = arith.mulf %4, %5 : vector<8x128xf32>
    %7 = vector.broadcast %2 : vector<1x128xf32> to vector<8x128xf32>
    %8 = arith.addf %7, %6 : vector<8x128xf32>
    %cst_5 = arith.constant 0.000000e+00 : f32
    %9 = vector.broadcast %cst_5 : f32 to vector<8x128xf32>
    %10 = arith.maximumf %8, %9 : vector<8x128xf32>
    %cst_6 = arith.constant 1.000000e-10 : f32
    %11 = vector.broadcast %cst_6 : f32 to vector<8x128xf32>
    %12 = arith.addf %10, %11 : vector<8x128xf32>
    %c0_7 = arith.constant 0 : index
    %c1 = arith.constant 1 : index
    %13 = vector.load %arg2[%c0_7, %c1] : memref<8x32xf32, #tpu.memory_space<vmem>>, vector<8x1xf32>
    %c1_8 = arith.constant 1 : index
    %c0_9 = arith.constant 0 : index
    %14 = vector.load %arg3[%c1_8, %c0_9] : memref<32x128xf32, #tpu.memory_space<vmem>>, vector<1x128xf32>
    %c1_10 = arith.constant 1 : index
    %c0_11 = arith.constant 0 : index
    %15 = vector.load %arg4[%c1_10, %c0_11] : memref<32x128xf32, #tpu.memory_space<vmem>>, vector<1x128xf32>
    %16 = vector.broadcast %13 : vector<8x1xf32> to vector<8x128xf32>
    %17 = vector.broadcast %15 : vector<1x128xf32> to vector<8x128xf32>
    %18 = arith.mulf %16, %17 : vector<8x128xf32>
    %19 = vector.broadcast %14 : vector<1x128xf32> to vector<8x128xf32>
    %20 = arith.addf %19, %18 : vector<8x128xf32>
    %cst_12 = arith.constant 0.000000e+00 : f32
    %21 = vector.broadcast %cst_12 : f32 to vector<8x128xf32>
    %22 = arith.maximumf %20, %21 : vector<8x128xf32>
    %cst_13 = arith.constant 1.000000e-10 : f32
    %23 = vector.broadcast %cst_13 : f32 to vector<8x128xf32>
    %24 = arith.addf %22, %23 : vector<8x128xf32>
    %25 = arith.mulf %12, %24 : vector<8x128xf32>
    %c0_14 = arith.constant 0 : index
    %c2 = arith.constant 2 : index
    %26 = vector.load %arg2[%c0_14, %c2] : memref<8x32xf32, #tpu.memory_space<vmem>>, vector<8x1xf32>
    %c2_15 = arith.constant 2 : index
    %c0_16 = arith.constant 0 : index
    %27 = vector.load %arg3[%c2_15, %c0_16] : memref<32x128xf32, #tpu.memory_space<vmem>>, vector<1x128xf32>
    %c2_17 = arith.constant 2 : index
    %c0_18 = arith.constant 0 : index
    %28 = vector.load %arg4[%c2_17, %c0_18] : memref<32x128xf32, #tpu.memory_space<vmem>>, vector<1x128xf32>
    %29 = vector.broadcast %26 : vector<8x1xf32> to vector<8x128xf32>
    %30 = vector.broadcast %28 : vector<1x128xf32> to vector<8x128xf32>
    %31 = arith.mulf %29, %30 : vector<8x128xf32>
    %32 = vector.broadcast %27 : vector<1x128xf32> to vector<8x128xf32>
    %33 = arith.addf %32, %31 : vector<8x128xf32>
    %cst_19 = arith.constant 0.000000e+00 : f32
    %34 = vector.broadcast %cst_19 : f32 to vector<8x128xf32>
    %35 = arith.maximumf %33, %34 : vector<8x128xf32>
    %cst_20 = arith.constant 1.000000e-10 : f32
    %36 = vector.broadcast %cst_20 : f32 to vector<8x128xf32>
    %37 = arith.addf %35, %36 : vector<8x128xf32>
    %38 = arith.mulf %25, %37 : vector<8x128xf32>
    %39 = math.log %38 : vector<8x128xf32>
    %40 = arith.addf %0, %39 : vector<8x128xf32>
    %c0_21 = arith.constant 0 : index
    %c3 = arith.constant 3 : index
    %41 = vector.load %arg2[%c0_21, %c3] : memref<8x32xf32, #tpu.memory_space<vmem>>, vector<8x1xf32>
    %c3_22 = arith.constant 3 : index
    %c0_23 = arith.constant 0 : index
    %42 = vector.load %arg3[%c3_22, %c0_23] : memref<32x128xf32, #tpu.memory_space<vmem>>, vector<1x128xf32>
    %c3_24 = arith.constant 3 : index
    %c0_25 = arith.constant 0 : index
    %43 = vector.load %arg4[%c3_24, %c0_25] : memref<32x128xf32, #tpu.memory_space<vmem>>, vector<1x128xf32>
    %44 = vector.broadcast %41 : vector<8x1xf32> to vector<8x128xf32>
    %45 = vector.broadcast %43 : vector<1x128xf32> to vector<8x128xf32>
    %46 = arith.mulf %44, %45 : vector<8x128xf32>
    %47 = vector.broadcast %42 : vector<1x128xf32> to vector<8x128xf32>
    %48 = arith.addf %47, %46 : vector<8x128xf32>
    %cst_26 = arith.constant 0.000000e+00 : f32
    %49 = vector.broadcast %cst_26 : f32 to vector<8x128xf32>
    %50 = arith.maximumf %48, %49 : vector<8x128xf32>
    %cst_27 = arith.constant 1.000000e-10 : f32
    %51 = vector.broadcast %cst_27 : f32 to vector<8x128xf32>
    %52 = arith.addf %50, %51 : vector<8x128xf32>
    %c0_28 = arith.constant 0 : index
    %c4 = arith.constant 4 : index
    %53 = vector.load %arg2[%c0_28, %c4] : memref<8x32xf32, #tpu.memory_space<vmem>>, vector<8x1xf32>
    %c4_29 = arith.constant 4 : index
    %c0_30 = arith.constant 0 : index
    %54 = vector.load %arg3[%c4_29, %c0_30] : memref<32x128xf32, #tpu.memory_space<vmem>>, vector<1x128xf32>
    %c4_31 = arith.constant 4 : index
    %c0_32 = arith.constant 0 : index
    %55 = vector.load %arg4[%c4_31, %c0_32] : memref<32x128xf32, #tpu.memory_space<vmem>>, vector<1x128xf32>
    %56 = vector.broadcast %53 : vector<8x1xf32> to vector<8x128xf32>
    %57 = vector.broadcast %55 : vector<1x128xf32> to vector<8x128xf32>
    %58 = arith.mulf %56, %57 : vector<8x128xf32>
    %59 = vector.broadcast %54 : vector<1x128xf32> to vector<8x128xf32>
    %60 = arith.addf %59, %58 : vector<8x128xf32>
    %cst_33 = arith.constant 0.000000e+00 : f32
    %61 = vector.broadcast %cst_33 : f32 to vector<8x128xf32>
    %62 = arith.maximumf %60, %61 : vector<8x128xf32>
    %cst_34 = arith.constant 1.000000e-10 : f32
    %63 = vector.broadcast %cst_34 : f32 to vector<8x128xf32>
    %64 = arith.addf %62, %63 : vector<8x128xf32>
    %65 = arith.mulf %52, %64 : vector<8x128xf32>
    %c0_35 = arith.constant 0 : index
    %c5 = arith.constant 5 : index
    %66 = vector.load %arg2[%c0_35, %c5] : memref<8x32xf32, #tpu.memory_space<vmem>>, vector<8x1xf32>
    %c5_36 = arith.constant 5 : index
    %c0_37 = arith.constant 0 : index
    %67 = vector.load %arg3[%c5_36, %c0_37] : memref<32x128xf32, #tpu.memory_space<vmem>>, vector<1x128xf32>
    %c5_38 = arith.constant 5 : index
    %c0_39 = arith.constant 0 : index
    %68 = vector.load %arg4[%c5_38, %c0_39] : memref<32x128xf32, #tpu.memory_space<vmem>>, vector<1x128xf32>
    %69 = vector.broadcast %66 : vector<8x1xf32> to vector<8x128xf32>
    %70 = vector.broadcast %68 : vector<1x128xf32> to vector<8x128xf32>
    %71 = arith.mulf %69, %70 : vector<8x128xf32>
    %72 = vector.broadcast %67 : vector<1x128xf32> to vector<8x128xf32>
    %73 = arith.addf %72, %71 : vector<8x128xf32>
    %cst_40 = arith.constant 0.000000e+00 : f32
    %74 = vector.broadcast %cst_40 : f32 to vector<8x128xf32>
    %75 = arith.maximumf %73, %74 : vector<8x128xf32>
    %cst_41 = arith.constant 1.000000e-10 : f32
    %76 = vector.broadcast %cst_41 : f32 to vector<8x128xf32>
    %77 = arith.addf %75, %76 : vector<8x128xf32>
    %78 = arith.mulf %65, %77 : vector<8x128xf32>
    %79 = math.log %78 : vector<8x128xf32>
    %80 = arith.addf %40, %79 : vector<8x128xf32>
    %c0_42 = arith.constant 0 : index
    %c6 = arith.constant 6 : index
    %81 = vector.load %arg2[%c0_42, %c6] : memref<8x32xf32, #tpu.memory_space<vmem>>, vector<8x1xf32>
    %c6_43 = arith.constant 6 : index
    %c0_44 = arith.constant 0 : index
    %82 = vector.load %arg3[%c6_43, %c0_44] : memref<32x128xf32, #tpu.memory_space<vmem>>, vector<1x128xf32>
    %c6_45 = arith.constant 6 : index
    %c0_46 = arith.constant 0 : index
    %83 = vector.load %arg4[%c6_45, %c0_46] : memref<32x128xf32, #tpu.memory_space<vmem>>, vector<1x128xf32>
    %84 = vector.broadcast %81 : vector<8x1xf32> to vector<8x128xf32>
    %85 = vector.broadcast %83 : vector<1x128xf32> to vector<8x128xf32>
    %86 = arith.mulf %84, %85 : vector<8x128xf32>
    %87 = vector.broadcast %82 : vector<1x128xf32> to vector<8x128xf32>
    %88 = arith.addf %87, %86 : vector<8x128xf32>
    %cst_47 = arith.constant 0.000000e+00 : f32
    %89 = vector.broadcast %cst_47 : f32 to vector<8x128xf32>
    %90 = arith.maximumf %88, %89 : vector<8x128xf32>
    %cst_48 = arith.constant 1.000000e-10 : f32
    %91 = vector.broadcast %cst_48 : f32 to vector<8x128xf32>
    %92 = arith.addf %90, %91 : vector<8x128xf32>
    %c0_49 = arith.constant 0 : index
    %c7 = arith.constant 7 : index
    %93 = vector.load %arg2[%c0_49, %c7] : memref<8x32xf32, #tpu.memory_space<vmem>>, vector<8x1xf32>
    %c7_50 = arith.constant 7 : index
    %c0_51 = arith.constant 0 : index
    %94 = vector.load %arg3[%c7_50, %c0_51] : memref<32x128xf32, #tpu.memory_space<vmem>>, vector<1x128xf32>
    %c7_52 = arith.constant 7 : index
    %c0_53 = arith.constant 0 : index
    %95 = vector.load %arg4[%c7_52, %c0_53] : memref<32x128xf32, #tpu.memory_space<vmem>>, vector<1x128xf32>
    %96 = vector.broadcast %93 : vector<8x1xf32> to vector<8x128xf32>
    %97 = vector.broadcast %95 : vector<1x128xf32> to vector<8x128xf32>
    %98 = arith.mulf %96, %97 : vector<8x128xf32>
    %99 = vector.broadcast %94 : vector<1x128xf32> to vector<8x128xf32>
    %100 = arith.addf %99, %98 : vector<8x128xf32>
    %cst_54 = arith.constant 0.000000e+00 : f32
    %101 = vector.broadcast %cst_54 : f32 to vector<8x128xf32>
    %102 = arith.maximumf %100, %101 : vector<8x128xf32>
    %cst_55 = arith.constant 1.000000e-10 : f32
    %103 = vector.broadcast %cst_55 : f32 to vector<8x128xf32>
    %104 = arith.addf %102, %103 : vector<8x128xf32>
    %105 = arith.mulf %92, %104 : vector<8x128xf32>
    %c0_56 = arith.constant 0 : index
    %c8 = arith.constant 8 : index
    %106 = vector.load %arg2[%c0_56, %c8] : memref<8x32xf32, #tpu.memory_space<vmem>>, vector<8x1xf32>
    %c8_57 = arith.constant 8 : index
    %c0_58 = arith.constant 0 : index
    %107 = vector.load %arg3[%c8_57, %c0_58] : memref<32x128xf32, #tpu.memory_space<vmem>>, vector<1x128xf32>
    %c8_59 = arith.constant 8 : index
    %c0_60 = arith.constant 0 : index
    %108 = vector.load %arg4[%c8_59, %c0_60] : memref<32x128xf32, #tpu.memory_space<vmem>>, vector<1x128xf32>
    %109 = vector.broadcast %106 : vector<8x1xf32> to vector<8x128xf32>
    %110 = vector.broadcast %108 : vector<1x128xf32> to vector<8x128xf32>
    %111 = arith.mulf %109, %110 : vector<8x128xf32>
    %112 = vector.broadcast %107 : vector<1x128xf32> to vector<8x128xf32>
    %113 = arith.addf %112, %111 : vector<8x128xf32>
    %cst_61 = arith.constant 0.000000e+00 : f32
    %114 = vector.broadcast %cst_61 : f32 to vector<8x128xf32>
    %115 = arith.maximumf %113, %114 : vector<8x128xf32>
    %cst_62 = arith.constant 1.000000e-10 : f32
    %116 = vector.broadcast %cst_62 : f32 to vector<8x128xf32>
    %117 = arith.addf %115, %116 : vector<8x128xf32>
    %118 = arith.mulf %105, %117 : vector<8x128xf32>
    %119 = math.log %118 : vector<8x128xf32>
    %120 = arith.addf %80, %119 : vector<8x128xf32>
    %c0_63 = arith.constant 0 : index
    %c9 = arith.constant 9 : index
    %121 = vector.load %arg2[%c0_63, %c9] : memref<8x32xf32, #tpu.memory_space<vmem>>, vector<8x1xf32>
    %c9_64 = arith.constant 9 : index
    %c0_65 = arith.constant 0 : index
    %122 = vector.load %arg3[%c9_64, %c0_65] : memref<32x128xf32, #tpu.memory_space<vmem>>, vector<1x128xf32>
    %c9_66 = arith.constant 9 : index
    %c0_67 = arith.constant 0 : index
    %123 = vector.load %arg4[%c9_66, %c0_67] : memref<32x128xf32, #tpu.memory_space<vmem>>, vector<1x128xf32>
    %124 = vector.broadcast %121 : vector<8x1xf32> to vector<8x128xf32>
    %125 = vector.broadcast %123 : vector<1x128xf32> to vector<8x128xf32>
    %126 = arith.mulf %124, %125 : vector<8x128xf32>
    %127 = vector.broadcast %122 : vector<1x128xf32> to vector<8x128xf32>
    %128 = arith.addf %127, %126 : vector<8x128xf32>
    %cst_68 = arith.constant 0.000000e+00 : f32
    %129 = vector.broadcast %cst_68 : f32 to vector<8x128xf32>
    %130 = arith.maximumf %128, %129 : vector<8x128xf32>
    %cst_69 = arith.constant 1.000000e-10 : f32
    %131 = vector.broadcast %cst_69 : f32 to vector<8x128xf32>
    %132 = arith.addf %130, %131 : vector<8x128xf32>
    %c0_70 = arith.constant 0 : index
    %c10 = arith.constant 10 : index
    %133 = vector.load %arg2[%c0_70, %c10] : memref<8x32xf32, #tpu.memory_space<vmem>>, vector<8x1xf32>
    %c10_71 = arith.constant 10 : index
    %c0_72 = arith.constant 0 : index
    %134 = vector.load %arg3[%c10_71, %c0_72] : memref<32x128xf32, #tpu.memory_space<vmem>>, vector<1x128xf32>
    %c10_73 = arith.constant 10 : index
    %c0_74 = arith.constant 0 : index
    %135 = vector.load %arg4[%c10_73, %c0_74] : memref<32x128xf32, #tpu.memory_space<vmem>>, vector<1x128xf32>
    %136 = vector.broadcast %133 : vector<8x1xf32> to vector<8x128xf32>
    %137 = vector.broadcast %135 : vector<1x128xf32> to vector<8x128xf32>
    %138 = arith.mulf %136, %137 : vector<8x128xf32>
    %139 = vector.broadcast %134 : vector<1x128xf32> to vector<8x128xf32>
    %140 = arith.addf %139, %138 : vector<8x128xf32>
    %cst_75 = arith.constant 0.000000e+00 : f32
    %141 = vector.broadcast %cst_75 : f32 to vector<8x128xf32>
    %142 = arith.maximumf %140, %141 : vector<8x128xf32>
    %cst_76 = arith.constant 1.000000e-10 : f32
    %143 = vector.broadcast %cst_76 : f32 to vector<8x128xf32>
    %144 = arith.addf %142, %143 : vector<8x128xf32>
    %145 = arith.mulf %132, %144 : vector<8x128xf32>
    %c0_77 = arith.constant 0 : index
    %c11 = arith.constant 11 : index
    %146 = vector.load %arg2[%c0_77, %c11] : memref<8x32xf32, #tpu.memory_space<vmem>>, vector<8x1xf32>
    %c11_78 = arith.constant 11 : index
    %c0_79 = arith.constant 0 : index
    %147 = vector.load %arg3[%c11_78, %c0_79] : memref<32x128xf32, #tpu.memory_space<vmem>>, vector<1x128xf32>
    %c11_80 = arith.constant 11 : index
    %c0_81 = arith.constant 0 : index
    %148 = vector.load %arg4[%c11_80, %c0_81] : memref<32x128xf32, #tpu.memory_space<vmem>>, vector<1x128xf32>
    %149 = vector.broadcast %146 : vector<8x1xf32> to vector<8x128xf32>
    %150 = vector.broadcast %148 : vector<1x128xf32> to vector<8x128xf32>
    %151 = arith.mulf %149, %150 : vector<8x128xf32>
    %152 = vector.broadcast %147 : vector<1x128xf32> to vector<8x128xf32>
    %153 = arith.addf %152, %151 : vector<8x128xf32>
    %cst_82 = arith.constant 0.000000e+00 : f32
    %154 = vector.broadcast %cst_82 : f32 to vector<8x128xf32>
    %155 = arith.maximumf %153, %154 : vector<8x128xf32>
    %cst_83 = arith.constant 1.000000e-10 : f32
    %156 = vector.broadcast %cst_83 : f32 to vector<8x128xf32>
    %157 = arith.addf %155, %156 : vector<8x128xf32>
    %158 = arith.mulf %145, %157 : vector<8x128xf32>
    %159 = math.log %158 : vector<8x128xf32>
    %160 = arith.addf %120, %159 : vector<8x128xf32>
    %c0_84 = arith.constant 0 : index
    %c12 = arith.constant 12 : index
    %161 = vector.load %arg2[%c0_84, %c12] : memref<8x32xf32, #tpu.memory_space<vmem>>, vector<8x1xf32>
    %c12_85 = arith.constant 12 : index
    %c0_86 = arith.constant 0 : index
    %162 = vector.load %arg3[%c12_85, %c0_86] : memref<32x128xf32, #tpu.memory_space<vmem>>, vector<1x128xf32>
    %c12_87 = arith.constant 12 : index
    %c0_88 = arith.constant 0 : index
    %163 = vector.load %arg4[%c12_87, %c0_88] : memref<32x128xf32, #tpu.memory_space<vmem>>, vector<1x128xf32>
    %164 = vector.broadcast %161 : vector<8x1xf32> to vector<8x128xf32>
    %165 = vector.broadcast %163 : vector<1x128xf32> to vector<8x128xf32>
    %166 = arith.mulf %164, %165 : vector<8x128xf32>
    %167 = vector.broadcast %162 : vector<1x128xf32> to vector<8x128xf32>
    %168 = arith.addf %167, %166 : vector<8x128xf32>
    %cst_89 = arith.constant 0.000000e+00 : f32
    %169 = vector.broadcast %cst_89 : f32 to vector<8x128xf32>
    %170 = arith.maximumf %168, %169 : vector<8x128xf32>
    %cst_90 = arith.constant 1.000000e-10 : f32
    %171 = vector.broadcast %cst_90 : f32 to vector<8x128xf32>
    %172 = arith.addf %170, %171 : vector<8x128xf32>
    %c0_91 = arith.constant 0 : index
    %c13 = arith.constant 13 : index
    %173 = vector.load %arg2[%c0_91, %c13] : memref<8x32xf32, #tpu.memory_space<vmem>>, vector<8x1xf32>
    %c13_92 = arith.constant 13 : index
    %c0_93 = arith.constant 0 : index
    %174 = vector.load %arg3[%c13_92, %c0_93] : memref<32x128xf32, #tpu.memory_space<vmem>>, vector<1x128xf32>
    %c13_94 = arith.constant 13 : index
    %c0_95 = arith.constant 0 : index
    %175 = vector.load %arg4[%c13_94, %c0_95] : memref<32x128xf32, #tpu.memory_space<vmem>>, vector<1x128xf32>
    %176 = vector.broadcast %173 : vector<8x1xf32> to vector<8x128xf32>
    %177 = vector.broadcast %175 : vector<1x128xf32> to vector<8x128xf32>
    %178 = arith.mulf %176, %177 : vector<8x128xf32>
    %179 = vector.broadcast %174 : vector<1x128xf32> to vector<8x128xf32>
    %180 = arith.addf %179, %178 : vector<8x128xf32>
    %cst_96 = arith.constant 0.000000e+00 : f32
    %181 = vector.broadcast %cst_96 : f32 to vector<8x128xf32>
    %182 = arith.maximumf %180, %181 : vector<8x128xf32>
    %cst_97 = arith.constant 1.000000e-10 : f32
    %183 = vector.broadcast %cst_97 : f32 to vector<8x128xf32>
    %184 = arith.addf %182, %183 : vector<8x128xf32>
    %185 = arith.mulf %172, %184 : vector<8x128xf32>
    %c0_98 = arith.constant 0 : index
    %c14 = arith.constant 14 : index
    %186 = vector.load %arg2[%c0_98, %c14] : memref<8x32xf32, #tpu.memory_space<vmem>>, vector<8x1xf32>
    %c14_99 = arith.constant 14 : index
    %c0_100 = arith.constant 0 : index
    %187 = vector.load %arg3[%c14_99, %c0_100] : memref<32x128xf32, #tpu.memory_space<vmem>>, vector<1x128xf32>
    %c14_101 = arith.constant 14 : index
    %c0_102 = arith.constant 0 : index
    %188 = vector.load %arg4[%c14_101, %c0_102] : memref<32x128xf32, #tpu.memory_space<vmem>>, vector<1x128xf32>
    %189 = vector.broadcast %186 : vector<8x1xf32> to vector<8x128xf32>
    %190 = vector.broadcast %188 : vector<1x128xf32> to vector<8x128xf32>
    %191 = arith.mulf %189, %190 : vector<8x128xf32>
    %192 = vector.broadcast %187 : vector<1x128xf32> to vector<8x128xf32>
    %193 = arith.addf %192, %191 : vector<8x128xf32>
    %cst_103 = arith.constant 0.000000e+00 : f32
    %194 = vector.broadcast %cst_103 : f32 to vector<8x128xf32>
    %195 = arith.maximumf %193, %194 : vector<8x128xf32>
    %cst_104 = arith.constant 1.000000e-10 : f32
    %196 = vector.broadcast %cst_104 : f32 to vector<8x128xf32>
    %197 = arith.addf %195, %196 : vector<8x128xf32>
    %198 = arith.mulf %185, %197 : vector<8x128xf32>
    %199 = math.log %198 : vector<8x128xf32>
    %200 = arith.addf %160, %199 : vector<8x128xf32>
    %c0_105 = arith.constant 0 : index
    %c15 = arith.constant 15 : index
    %201 = vector.load %arg2[%c0_105, %c15] : memref<8x32xf32, #tpu.memory_space<vmem>>, vector<8x1xf32>
    %c15_106 = arith.constant 15 : index
    %c0_107 = arith.constant 0 : index
    %202 = vector.load %arg3[%c15_106, %c0_107] : memref<32x128xf32, #tpu.memory_space<vmem>>, vector<1x128xf32>
    %c15_108 = arith.constant 15 : index
    %c0_109 = arith.constant 0 : index
    %203 = vector.load %arg4[%c15_108, %c0_109] : memref<32x128xf32, #tpu.memory_space<vmem>>, vector<1x128xf32>
    %204 = vector.broadcast %201 : vector<8x1xf32> to vector<8x128xf32>
    %205 = vector.broadcast %203 : vector<1x128xf32> to vector<8x128xf32>
    %206 = arith.mulf %204, %205 : vector<8x128xf32>
    %207 = vector.broadcast %202 : vector<1x128xf32> to vector<8x128xf32>
    %208 = arith.addf %207, %206 : vector<8x128xf32>
    %cst_110 = arith.constant 0.000000e+00 : f32
    %209 = vector.broadcast %cst_110 : f32 to vector<8x128xf32>
    %210 = arith.maximumf %208, %209 : vector<8x128xf32>
    %cst_111 = arith.constant 1.000000e-10 : f32
    %211 = vector.broadcast %cst_111 : f32 to vector<8x128xf32>
    %212 = arith.addf %210, %211 : vector<8x128xf32>
    %c0_112 = arith.constant 0 : index
    %c16 = arith.constant 16 : index
    %213 = vector.load %arg2[%c0_112, %c16] : memref<8x32xf32, #tpu.memory_space<vmem>>, vector<8x1xf32>
    %c16_113 = arith.constant 16 : index
    %c0_114 = arith.constant 0 : index
    %214 = vector.load %arg3[%c16_113, %c0_114] : memref<32x128xf32, #tpu.memory_space<vmem>>, vector<1x128xf32>
    %c16_115 = arith.constant 16 : index
    %c0_116 = arith.constant 0 : index
    %215 = vector.load %arg4[%c16_115, %c0_116] : memref<32x128xf32, #tpu.memory_space<vmem>>, vector<1x128xf32>
    %216 = vector.broadcast %213 : vector<8x1xf32> to vector<8x128xf32>
    %217 = vector.broadcast %215 : vector<1x128xf32> to vector<8x128xf32>
    %218 = arith.mulf %216, %217 : vector<8x128xf32>
    %219 = vector.broadcast %214 : vector<1x128xf32> to vector<8x128xf32>
    %220 = arith.addf %219, %218 : vector<8x128xf32>
    %cst_117 = arith.constant 0.000000e+00 : f32
    %221 = vector.broadcast %cst_117 : f32 to vector<8x128xf32>
    %222 = arith.maximumf %220, %221 : vector<8x128xf32>
    %cst_118 = arith.constant 1.000000e-10 : f32
    %223 = vector.broadcast %cst_118 : f32 to vector<8x128xf32>
    %224 = arith.addf %222, %223 : vector<8x128xf32>
    %225 = arith.mulf %212, %224 : vector<8x128xf32>
    %c0_119 = arith.constant 0 : index
    %c17 = arith.constant 17 : index
    %226 = vector.load %arg2[%c0_119, %c17] : memref<8x32xf32, #tpu.memory_space<vmem>>, vector<8x1xf32>
    %c17_120 = arith.constant 17 : index
    %c0_121 = arith.constant 0 : index
    %227 = vector.load %arg3[%c17_120, %c0_121] : memref<32x128xf32, #tpu.memory_space<vmem>>, vector<1x128xf32>
    %c17_122 = arith.constant 17 : index
    %c0_123 = arith.constant 0 : index
    %228 = vector.load %arg4[%c17_122, %c0_123] : memref<32x128xf32, #tpu.memory_space<vmem>>, vector<1x128xf32>
    %229 = vector.broadcast %226 : vector<8x1xf32> to vector<8x128xf32>
    %230 = vector.broadcast %228 : vector<1x128xf32> to vector<8x128xf32>
    %231 = arith.mulf %229, %230 : vector<8x128xf32>
    %232 = vector.broadcast %227 : vector<1x128xf32> to vector<8x128xf32>
    %233 = arith.addf %232, %231 : vector<8x128xf32>
    %cst_124 = arith.constant 0.000000e+00 : f32
    %234 = vector.broadcast %cst_124 : f32 to vector<8x128xf32>
    %235 = arith.maximumf %233, %234 : vector<8x128xf32>
    %cst_125 = arith.constant 1.000000e-10 : f32
    %236 = vector.broadcast %cst_125 : f32 to vector<8x128xf32>
    %237 = arith.addf %235, %236 : vector<8x128xf32>
    %238 = arith.mulf %225, %237 : vector<8x128xf32>
    %239 = math.log %238 : vector<8x128xf32>
    %240 = arith.addf %200, %239 : vector<8x128xf32>
    %c0_126 = arith.constant 0 : index
    %c18 = arith.constant 18 : index
    %241 = vector.load %arg2[%c0_126, %c18] : memref<8x32xf32, #tpu.memory_space<vmem>>, vector<8x1xf32>
    %c18_127 = arith.constant 18 : index
    %c0_128 = arith.constant 0 : index
    %242 = vector.load %arg3[%c18_127, %c0_128] : memref<32x128xf32, #tpu.memory_space<vmem>>, vector<1x128xf32>
    %c18_129 = arith.constant 18 : index
    %c0_130 = arith.constant 0 : index
    %243 = vector.load %arg4[%c18_129, %c0_130] : memref<32x128xf32, #tpu.memory_space<vmem>>, vector<1x128xf32>
    %244 = vector.broadcast %241 : vector<8x1xf32> to vector<8x128xf32>
    %245 = vector.broadcast %243 : vector<1x128xf32> to vector<8x128xf32>
    %246 = arith.mulf %244, %245 : vector<8x128xf32>
    %247 = vector.broadcast %242 : vector<1x128xf32> to vector<8x128xf32>
    %248 = arith.addf %247, %246 : vector<8x128xf32>
    %cst_131 = arith.constant 0.000000e+00 : f32
    %249 = vector.broadcast %cst_131 : f32 to vector<8x128xf32>
    %250 = arith.maximumf %248, %249 : vector<8x128xf32>
    %cst_132 = arith.constant 1.000000e-10 : f32
    %251 = vector.broadcast %cst_132 : f32 to vector<8x128xf32>
    %252 = arith.addf %250, %251 : vector<8x128xf32>
    %c0_133 = arith.constant 0 : index
    %c19 = arith.constant 19 : index
    %253 = vector.load %arg2[%c0_133, %c19] : memref<8x32xf32, #tpu.memory_space<vmem>>, vector<8x1xf32>
    %c19_134 = arith.constant 19 : index
    %c0_135 = arith.constant 0 : index
    %254 = vector.load %arg3[%c19_134, %c0_135] : memref<32x128xf32, #tpu.memory_space<vmem>>, vector<1x128xf32>
    %c19_136 = arith.constant 19 : index
    %c0_137 = arith.constant 0 : index
    %255 = vector.load %arg4[%c19_136, %c0_137] : memref<32x128xf32, #tpu.memory_space<vmem>>, vector<1x128xf32>
    %256 = vector.broadcast %253 : vector<8x1xf32> to vector<8x128xf32>
    %257 = vector.broadcast %255 : vector<1x128xf32> to vector<8x128xf32>
    %258 = arith.mulf %256, %257 : vector<8x128xf32>
    %259 = vector.broadcast %254 : vector<1x128xf32> to vector<8x128xf32>
    %260 = arith.addf %259, %258 : vector<8x128xf32>
    %cst_138 = arith.constant 0.000000e+00 : f32
    %261 = vector.broadcast %cst_138 : f32 to vector<8x128xf32>
    %262 = arith.maximumf %260, %261 : vector<8x128xf32>
    %cst_139 = arith.constant 1.000000e-10 : f32
    %263 = vector.broadcast %cst_139 : f32 to vector<8x128xf32>
    %264 = arith.addf %262, %263 : vector<8x128xf32>
    %265 = arith.mulf %252, %264 : vector<8x128xf32>
    %c0_140 = arith.constant 0 : index
    %c20 = arith.constant 20 : index
    %266 = vector.load %arg2[%c0_140, %c20] : memref<8x32xf32, #tpu.memory_space<vmem>>, vector<8x1xf32>
    %c20_141 = arith.constant 20 : index
    %c0_142 = arith.constant 0 : index
    %267 = vector.load %arg3[%c20_141, %c0_142] : memref<32x128xf32, #tpu.memory_space<vmem>>, vector<1x128xf32>
    %c20_143 = arith.constant 20 : index
    %c0_144 = arith.constant 0 : index
    %268 = vector.load %arg4[%c20_143, %c0_144] : memref<32x128xf32, #tpu.memory_space<vmem>>, vector<1x128xf32>
    %269 = vector.broadcast %266 : vector<8x1xf32> to vector<8x128xf32>
    %270 = vector.broadcast %268 : vector<1x128xf32> to vector<8x128xf32>
    %271 = arith.mulf %269, %270 : vector<8x128xf32>
    %272 = vector.broadcast %267 : vector<1x128xf32> to vector<8x128xf32>
    %273 = arith.addf %272, %271 : vector<8x128xf32>
    %cst_145 = arith.constant 0.000000e+00 : f32
    %274 = vector.broadcast %cst_145 : f32 to vector<8x128xf32>
    %275 = arith.maximumf %273, %274 : vector<8x128xf32>
    %cst_146 = arith.constant 1.000000e-10 : f32
    %276 = vector.broadcast %cst_146 : f32 to vector<8x128xf32>
    %277 = arith.addf %275, %276 : vector<8x128xf32>
    %278 = arith.mulf %265, %277 : vector<8x128xf32>
    %279 = math.log %278 : vector<8x128xf32>
    %280 = arith.addf %240, %279 : vector<8x128xf32>
    %c0_147 = arith.constant 0 : index
    %c21 = arith.constant 21 : index
    %281 = vector.load %arg2[%c0_147, %c21] : memref<8x32xf32, #tpu.memory_space<vmem>>, vector<8x1xf32>
    %c21_148 = arith.constant 21 : index
    %c0_149 = arith.constant 0 : index
    %282 = vector.load %arg3[%c21_148, %c0_149] : memref<32x128xf32, #tpu.memory_space<vmem>>, vector<1x128xf32>
    %c21_150 = arith.constant 21 : index
    %c0_151 = arith.constant 0 : index
    %283 = vector.load %arg4[%c21_150, %c0_151] : memref<32x128xf32, #tpu.memory_space<vmem>>, vector<1x128xf32>
    %284 = vector.broadcast %281 : vector<8x1xf32> to vector<8x128xf32>
    %285 = vector.broadcast %283 : vector<1x128xf32> to vector<8x128xf32>
    %286 = arith.mulf %284, %285 : vector<8x128xf32>
    %287 = vector.broadcast %282 : vector<1x128xf32> to vector<8x128xf32>
    %288 = arith.addf %287, %286 : vector<8x128xf32>
    %cst_152 = arith.constant 0.000000e+00 : f32
    %289 = vector.broadcast %cst_152 : f32 to vector<8x128xf32>
    %290 = arith.maximumf %288, %289 : vector<8x128xf32>
    %cst_153 = arith.constant 1.000000e-10 : f32
    %291 = vector.broadcast %cst_153 : f32 to vector<8x128xf32>
    %292 = arith.addf %290, %291 : vector<8x128xf32>
    %c0_154 = arith.constant 0 : index
    %c22 = arith.constant 22 : index
    %293 = vector.load %arg2[%c0_154, %c22] : memref<8x32xf32, #tpu.memory_space<vmem>>, vector<8x1xf32>
    %c22_155 = arith.constant 22 : index
    %c0_156 = arith.constant 0 : index
    %294 = vector.load %arg3[%c22_155, %c0_156] : memref<32x128xf32, #tpu.memory_space<vmem>>, vector<1x128xf32>
    %c22_157 = arith.constant 22 : index
    %c0_158 = arith.constant 0 : index
    %295 = vector.load %arg4[%c22_157, %c0_158] : memref<32x128xf32, #tpu.memory_space<vmem>>, vector<1x128xf32>
    %296 = vector.broadcast %293 : vector<8x1xf32> to vector<8x128xf32>
    %297 = vector.broadcast %295 : vector<1x128xf32> to vector<8x128xf32>
    %298 = arith.mulf %296, %297 : vector<8x128xf32>
    %299 = vector.broadcast %294 : vector<1x128xf32> to vector<8x128xf32>
    %300 = arith.addf %299, %298 : vector<8x128xf32>
    %cst_159 = arith.constant 0.000000e+00 : f32
    %301 = vector.broadcast %cst_159 : f32 to vector<8x128xf32>
    %302 = arith.maximumf %300, %301 : vector<8x128xf32>
    %cst_160 = arith.constant 1.000000e-10 : f32
    %303 = vector.broadcast %cst_160 : f32 to vector<8x128xf32>
    %304 = arith.addf %302, %303 : vector<8x128xf32>
    %305 = arith.mulf %292, %304 : vector<8x128xf32>
    %c0_161 = arith.constant 0 : index
    %c23 = arith.constant 23 : index
    %306 = vector.load %arg2[%c0_161, %c23] : memref<8x32xf32, #tpu.memory_space<vmem>>, vector<8x1xf32>
    %c23_162 = arith.constant 23 : index
    %c0_163 = arith.constant 0 : index
    %307 = vector.load %arg3[%c23_162, %c0_163] : memref<32x128xf32, #tpu.memory_space<vmem>>, vector<1x128xf32>
    %c23_164 = arith.constant 23 : index
    %c0_165 = arith.constant 0 : index
    %308 = vector.load %arg4[%c23_164, %c0_165] : memref<32x128xf32, #tpu.memory_space<vmem>>, vector<1x128xf32>
    %309 = vector.broadcast %306 : vector<8x1xf32> to vector<8x128xf32>
    %310 = vector.broadcast %308 : vector<1x128xf32> to vector<8x128xf32>
    %311 = arith.mulf %309, %310 : vector<8x128xf32>
    %312 = vector.broadcast %307 : vector<1x128xf32> to vector<8x128xf32>
    %313 = arith.addf %312, %311 : vector<8x128xf32>
    %cst_166 = arith.constant 0.000000e+00 : f32
    %314 = vector.broadcast %cst_166 : f32 to vector<8x128xf32>
    %315 = arith.maximumf %313, %314 : vector<8x128xf32>
    %cst_167 = arith.constant 1.000000e-10 : f32
    %316 = vector.broadcast %cst_167 : f32 to vector<8x128xf32>
    %317 = arith.addf %315, %316 : vector<8x128xf32>
    %318 = arith.mulf %305, %317 : vector<8x128xf32>
    %319 = math.log %318 : vector<8x128xf32>
    %320 = arith.addf %280, %319 : vector<8x128xf32>
    %c0_168 = arith.constant 0 : index
    %c24 = arith.constant 24 : index
    %321 = vector.load %arg2[%c0_168, %c24] : memref<8x32xf32, #tpu.memory_space<vmem>>, vector<8x1xf32>
    %c24_169 = arith.constant 24 : index
    %c0_170 = arith.constant 0 : index
    %322 = vector.load %arg3[%c24_169, %c0_170] : memref<32x128xf32, #tpu.memory_space<vmem>>, vector<1x128xf32>
    %c24_171 = arith.constant 24 : index
    %c0_172 = arith.constant 0 : index
    %323 = vector.load %arg4[%c24_171, %c0_172] : memref<32x128xf32, #tpu.memory_space<vmem>>, vector<1x128xf32>
    %324 = vector.broadcast %321 : vector<8x1xf32> to vector<8x128xf32>
    %325 = vector.broadcast %323 : vector<1x128xf32> to vector<8x128xf32>
    %326 = arith.mulf %324, %325 : vector<8x128xf32>
    %327 = vector.broadcast %322 : vector<1x128xf32> to vector<8x128xf32>
    %328 = arith.addf %327, %326 : vector<8x128xf32>
    %cst_173 = arith.constant 0.000000e+00 : f32
    %329 = vector.broadcast %cst_173 : f32 to vector<8x128xf32>
    %330 = arith.maximumf %328, %329 : vector<8x128xf32>
    %cst_174 = arith.constant 1.000000e-10 : f32
    %331 = vector.broadcast %cst_174 : f32 to vector<8x128xf32>
    %332 = arith.addf %330, %331 : vector<8x128xf32>
    %c0_175 = arith.constant 0 : index
    %c25 = arith.constant 25 : index
    %333 = vector.load %arg2[%c0_175, %c25] : memref<8x32xf32, #tpu.memory_space<vmem>>, vector<8x1xf32>
    %c25_176 = arith.constant 25 : index
    %c0_177 = arith.constant 0 : index
    %334 = vector.load %arg3[%c25_176, %c0_177] : memref<32x128xf32, #tpu.memory_space<vmem>>, vector<1x128xf32>
    %c25_178 = arith.constant 25 : index
    %c0_179 = arith.constant 0 : index
    %335 = vector.load %arg4[%c25_178, %c0_179] : memref<32x128xf32, #tpu.memory_space<vmem>>, vector<1x128xf32>
    %336 = vector.broadcast %333 : vector<8x1xf32> to vector<8x128xf32>
    %337 = vector.broadcast %335 : vector<1x128xf32> to vector<8x128xf32>
    %338 = arith.mulf %336, %337 : vector<8x128xf32>
    %339 = vector.broadcast %334 : vector<1x128xf32> to vector<8x128xf32>
    %340 = arith.addf %339, %338 : vector<8x128xf32>
    %cst_180 = arith.constant 0.000000e+00 : f32
    %341 = vector.broadcast %cst_180 : f32 to vector<8x128xf32>
    %342 = arith.maximumf %340, %341 : vector<8x128xf32>
    %cst_181 = arith.constant 1.000000e-10 : f32
    %343 = vector.broadcast %cst_181 : f32 to vector<8x128xf32>
    %344 = arith.addf %342, %343 : vector<8x128xf32>
    %345 = arith.mulf %332, %344 : vector<8x128xf32>
    %c0_182 = arith.constant 0 : index
    %c26 = arith.constant 26 : index
    %346 = vector.load %arg2[%c0_182, %c26] : memref<8x32xf32, #tpu.memory_space<vmem>>, vector<8x1xf32>
    %c26_183 = arith.constant 26 : index
    %c0_184 = arith.constant 0 : index
    %347 = vector.load %arg3[%c26_183, %c0_184] : memref<32x128xf32, #tpu.memory_space<vmem>>, vector<1x128xf32>
    %c26_185 = arith.constant 26 : index
    %c0_186 = arith.constant 0 : index
    %348 = vector.load %arg4[%c26_185, %c0_186] : memref<32x128xf32, #tpu.memory_space<vmem>>, vector<1x128xf32>
    %349 = vector.broadcast %346 : vector<8x1xf32> to vector<8x128xf32>
    %350 = vector.broadcast %348 : vector<1x128xf32> to vector<8x128xf32>
    %351 = arith.mulf %349, %350 : vector<8x128xf32>
    %352 = vector.broadcast %347 : vector<1x128xf32> to vector<8x128xf32>
    %353 = arith.addf %352, %351 : vector<8x128xf32>
    %cst_187 = arith.constant 0.000000e+00 : f32
    %354 = vector.broadcast %cst_187 : f32 to vector<8x128xf32>
    %355 = arith.maximumf %353, %354 : vector<8x128xf32>
    %cst_188 = arith.constant 1.000000e-10 : f32
    %356 = vector.broadcast %cst_188 : f32 to vector<8x128xf32>
    %357 = arith.addf %355, %356 : vector<8x128xf32>
    %358 = arith.mulf %345, %357 : vector<8x128xf32>
    %359 = math.log %358 : vector<8x128xf32>
    %360 = arith.addf %320, %359 : vector<8x128xf32>
    %c0_189 = arith.constant 0 : index
    %c27 = arith.constant 27 : index
    %361 = vector.load %arg2[%c0_189, %c27] : memref<8x32xf32, #tpu.memory_space<vmem>>, vector<8x1xf32>
    %c27_190 = arith.constant 27 : index
    %c0_191 = arith.constant 0 : index
    %362 = vector.load %arg3[%c27_190, %c0_191] : memref<32x128xf32, #tpu.memory_space<vmem>>, vector<1x128xf32>
    %c27_192 = arith.constant 27 : index
    %c0_193 = arith.constant 0 : index
    %363 = vector.load %arg4[%c27_192, %c0_193] : memref<32x128xf32, #tpu.memory_space<vmem>>, vector<1x128xf32>
    %364 = vector.broadcast %361 : vector<8x1xf32> to vector<8x128xf32>
    %365 = vector.broadcast %363 : vector<1x128xf32> to vector<8x128xf32>
    %366 = arith.mulf %364, %365 : vector<8x128xf32>
    %367 = vector.broadcast %362 : vector<1x128xf32> to vector<8x128xf32>
    %368 = arith.addf %367, %366 : vector<8x128xf32>
    %cst_194 = arith.constant 0.000000e+00 : f32
    %369 = vector.broadcast %cst_194 : f32 to vector<8x128xf32>
    %370 = arith.maximumf %368, %369 : vector<8x128xf32>
    %cst_195 = arith.constant 1.000000e-10 : f32
    %371 = vector.broadcast %cst_195 : f32 to vector<8x128xf32>
    %372 = arith.addf %370, %371 : vector<8x128xf32>
    %c0_196 = arith.constant 0 : index
    %c28 = arith.constant 28 : index
    %373 = vector.load %arg2[%c0_196, %c28] : memref<8x32xf32, #tpu.memory_space<vmem>>, vector<8x1xf32>
    %c28_197 = arith.constant 28 : index
    %c0_198 = arith.constant 0 : index
    %374 = vector.load %arg3[%c28_197, %c0_198] : memref<32x128xf32, #tpu.memory_space<vmem>>, vector<1x128xf32>
    %c28_199 = arith.constant 28 : index
    %c0_200 = arith.constant 0 : index
    %375 = vector.load %arg4[%c28_199, %c0_200] : memref<32x128xf32, #tpu.memory_space<vmem>>, vector<1x128xf32>
    %376 = vector.broadcast %373 : vector<8x1xf32> to vector<8x128xf32>
    %377 = vector.broadcast %375 : vector<1x128xf32> to vector<8x128xf32>
    %378 = arith.mulf %376, %377 : vector<8x128xf32>
    %379 = vector.broadcast %374 : vector<1x128xf32> to vector<8x128xf32>
    %380 = arith.addf %379, %378 : vector<8x128xf32>
    %cst_201 = arith.constant 0.000000e+00 : f32
    %381 = vector.broadcast %cst_201 : f32 to vector<8x128xf32>
    %382 = arith.maximumf %380, %381 : vector<8x128xf32>
    %cst_202 = arith.constant 1.000000e-10 : f32
    %383 = vector.broadcast %cst_202 : f32 to vector<8x128xf32>
    %384 = arith.addf %382, %383 : vector<8x128xf32>
    %385 = arith.mulf %372, %384 : vector<8x128xf32>
    %c0_203 = arith.constant 0 : index
    %c29 = arith.constant 29 : index
    %386 = vector.load %arg2[%c0_203, %c29] : memref<8x32xf32, #tpu.memory_space<vmem>>, vector<8x1xf32>
    %c29_204 = arith.constant 29 : index
    %c0_205 = arith.constant 0 : index
    %387 = vector.load %arg3[%c29_204, %c0_205] : memref<32x128xf32, #tpu.memory_space<vmem>>, vector<1x128xf32>
    %c29_206 = arith.constant 29 : index
    %c0_207 = arith.constant 0 : index
    %388 = vector.load %arg4[%c29_206, %c0_207] : memref<32x128xf32, #tpu.memory_space<vmem>>, vector<1x128xf32>
    %389 = vector.broadcast %386 : vector<8x1xf32> to vector<8x128xf32>
    %390 = vector.broadcast %388 : vector<1x128xf32> to vector<8x128xf32>
    %391 = arith.mulf %389, %390 : vector<8x128xf32>
    %392 = vector.broadcast %387 : vector<1x128xf32> to vector<8x128xf32>
    %393 = arith.addf %392, %391 : vector<8x128xf32>
    %cst_208 = arith.constant 0.000000e+00 : f32
    %394 = vector.broadcast %cst_208 : f32 to vector<8x128xf32>
    %395 = arith.maximumf %393, %394 : vector<8x128xf32>
    %cst_209 = arith.constant 1.000000e-10 : f32
    %396 = vector.broadcast %cst_209 : f32 to vector<8x128xf32>
    %397 = arith.addf %395, %396 : vector<8x128xf32>
    %398 = arith.mulf %385, %397 : vector<8x128xf32>
    %399 = math.log %398 : vector<8x128xf32>
    %400 = arith.addf %360, %399 : vector<8x128xf32>
    %c0_210 = arith.constant 0 : index
    %c30 = arith.constant 30 : index
    %401 = vector.load %arg2[%c0_210, %c30] : memref<8x32xf32, #tpu.memory_space<vmem>>, vector<8x1xf32>
    %c30_211 = arith.constant 30 : index
    %c0_212 = arith.constant 0 : index
    %402 = vector.load %arg3[%c30_211, %c0_212] : memref<32x128xf32, #tpu.memory_space<vmem>>, vector<1x128xf32>
    %c30_213 = arith.constant 30 : index
    %c0_214 = arith.constant 0 : index
    %403 = vector.load %arg4[%c30_213, %c0_214] : memref<32x128xf32, #tpu.memory_space<vmem>>, vector<1x128xf32>
    %404 = vector.broadcast %401 : vector<8x1xf32> to vector<8x128xf32>
    %405 = vector.broadcast %403 : vector<1x128xf32> to vector<8x128xf32>
    %406 = arith.mulf %404, %405 : vector<8x128xf32>
    %407 = vector.broadcast %402 : vector<1x128xf32> to vector<8x128xf32>
    %408 = arith.addf %407, %406 : vector<8x128xf32>
    %cst_215 = arith.constant 0.000000e+00 : f32
    %409 = vector.broadcast %cst_215 : f32 to vector<8x128xf32>
    %410 = arith.maximumf %408, %409 : vector<8x128xf32>
    %cst_216 = arith.constant 1.000000e-10 : f32
    %411 = vector.broadcast %cst_216 : f32 to vector<8x128xf32>
    %412 = arith.addf %410, %411 : vector<8x128xf32>
    %c0_217 = arith.constant 0 : index
    %c31 = arith.constant 31 : index
    %413 = vector.load %arg2[%c0_217, %c31] : memref<8x32xf32, #tpu.memory_space<vmem>>, vector<8x1xf32>
    %c31_218 = arith.constant 31 : index
    %c0_219 = arith.constant 0 : index
    %414 = vector.load %arg3[%c31_218, %c0_219] : memref<32x128xf32, #tpu.memory_space<vmem>>, vector<1x128xf32>
    %c31_220 = arith.constant 31 : index
    %c0_221 = arith.constant 0 : index
    %415 = vector.load %arg4[%c31_220, %c0_221] : memref<32x128xf32, #tpu.memory_space<vmem>>, vector<1x128xf32>
    %416 = vector.broadcast %413 : vector<8x1xf32> to vector<8x128xf32>
    %417 = vector.broadcast %415 : vector<1x128xf32> to vector<8x128xf32>
    %418 = arith.mulf %416, %417 : vector<8x128xf32>
    %419 = vector.broadcast %414 : vector<1x128xf32> to vector<8x128xf32>
    %420 = arith.addf %419, %418 : vector<8x128xf32>
    %cst_222 = arith.constant 0.000000e+00 : f32
    %421 = vector.broadcast %cst_222 : f32 to vector<8x128xf32>
    %422 = arith.maximumf %420, %421 : vector<8x128xf32>
    %cst_223 = arith.constant 1.000000e-10 : f32
    %423 = vector.broadcast %cst_223 : f32 to vector<8x128xf32>
    %424 = arith.addf %422, %423 : vector<8x128xf32>
    %425 = arith.mulf %412, %424 : vector<8x128xf32>
    %426 = math.log %425 : vector<8x128xf32>
    %427 = arith.addf %400, %426 : vector<8x128xf32>
    %cst_224 = arith.constant 1.000000e+00 : f32
    %428 = vector.broadcast %cst_224 : f32 to vector<8x128xf32>
    %429 = arith.subf %427, %428 : vector<8x128xf32>
    %430 = tpu.reciprocal %429 : vector<8x128xf32> -> vector<8x128xf32>
    %cst_225 = arith.constant 0.000000e+00 : f32
    %431 = vector.broadcast %cst_225 : f32 to vector<8x128xf32>
    %432 = arith.subf %431, %430 : vector<8x128xf32>
    %c0_226 = arith.constant 0 : index
    %c0_227 = arith.constant 0 : index
    %433 = vector.load %arg5[%c0_226, %c0_227] : memref<1x128xf32, #tpu.memory_space<vmem>>, vector<1x128xf32>
    %c0_228 = arith.constant 0 : index
    %c0_229 = arith.constant 0 : index
    %434 = vector.load %arg6[%c0_228, %c0_229] : memref<1x128xf32, #tpu.memory_space<vmem>>, vector<1x128xf32>
    %435 = vector.broadcast %434 : vector<1x128xf32> to vector<8x128xf32>
    %436 = arith.mulf %435, %432 : vector<8x128xf32>
    %437 = vector.broadcast %433 : vector<1x128xf32> to vector<8x128xf32>
    %438 = arith.addf %437, %436 : vector<8x128xf32>
    %c0_230 = arith.constant 0 : index
    %c0_231 = arith.constant 0 : index
    %439 = vector.load %arg7[%c0_230, %c0_231] : memref<8x128xf32, #tpu.memory_space<vmem>>, vector<8x128xf32>
    tpu.vector_store %arg7[%c0_230, %c0_231], %438 {strides = array<i32>} : memref<8x128xf32, #tpu.memory_space<vmem>>, vector<8x128xf32>,
    return
  }
  func.func @transform_0(%arg0: i32, %arg1: i32) -> (i32, i32) {
    %c0_i32 = arith.constant 0 : i32
    %c0_i32_0 = arith.constant 0 : i32
    return %arg0, %c0_i32 : i32, i32
  }
  func.func @transform_1(%arg0: i32, %arg1: i32) -> (i32, i32) {
    %c0_i32 = arith.constant 0 : i32
    %c0_i32_0 = arith.constant 0 : i32
    return %c0_i32, %arg1 : i32, i32
  }
  func.func @transform_2(%arg0: i32, %arg1: i32) -> (i32, i32) {
    %c0_i32 = arith.constant 0 : i32
    %c0_i32_0 = arith.constant 0 : i32
    return %c0_i32, %arg1 : i32, i32
  }
  func.func @transform_3(%arg0: i32, %arg1: i32) -> (i32, i32) {
    %c0_i32 = arith.constant 0 : i32
    %c0_i32_0 = arith.constant 0 : i32
    return %c0_i32, %arg1 : i32, i32
  }
  func.func @transform_4(%arg0: i32, %arg1: i32) -> (i32, i32) {
    %c0_i32 = arith.constant 0 : i32
    %c0_i32_0 = arith.constant 0 : i32
    return %c0_i32, %arg1 : i32, i32
  }
  func.func @transform_5(%arg0: i32, %arg1: i32) -> (i32, i32) {
    %c0_i32 = arith.constant 0 : i32
    return %arg0, %arg1 : i32, i32
  }
}

</mosaic_0001>

<llo_original>
// kernel: tpu_custom_call.1
$region0: #{tpu_custom_call.1}
  #allocation0 [shape = 'u32[]', space=smem, size = 0x4, offset = 0x4, fixed_abs, tag = 'smem constant byte address 0x4 - core index']
  #allocation1 [shape = 'u32[72,128]{1,0:T(1,128)}', space=vmem, size = 0x9000, scoped, tag = 'internal scratch']
  %s0 = inlined_call_operand.hbm [shape: f32[8,32], index: 0, kind: input, shape index: {}]
  %s1 = inlined_call_operand.hbm [shape: f32[32,256], index: 1, kind: input, shape index: {}]
  %s2 = inlined_call_operand.hbm [shape: f32[32,256], index: 2, kind: input, shape index: {}]
  %s3 = inlined_call_operand.vmem [shape: f32[1,256], index: 3, kind: input, shape index: {}]
  %s4 = inlined_call_operand.hbm [shape: f32[1,256], index: 4, kind: input, shape index: {}]
  %s5 = inlined_call_operand.hbm [shape: f32[8,256], index: 5, kind: output, shape index: {}]
  %s6 = sld [smem:[#allocation0]]
  $region69: #{tpu_custom_call.1} parent=0
    _
  %s8 = ssub.s32 1, %s6
  %s9 = scalar_select 0, %s8, %s6
  $region1: #{tpu_custom_call.1} parent=0
    #allocation2 [shape = 'u8[4096]{0}', space=vmem, size = 0x1000, scoped, tag = 'input window, operand 0, single buffered']
    #allocation3 [shape = 's32[2]{0}', space=sflag, size = 0x8, scoped, tag = 'scoped memory for tpu_custom_call.1']
    #allocation4 [shape = 's32[2]{0}', space=sflag, size = 0x8, scoped, tag = 'scoped memory for tpu_custom_call.1']
    #allocation5 [shape = 'u8[32768]{0}', space=vmem, size = 0x8000, scoped, tag = 'input window, operand 1']
    #allocation6 [shape = 's32[2]{0}', space=sflag, size = 0x8, scoped, tag = 'scoped memory for tpu_custom_call.1']
    #allocation7 [shape = 'u8[32768]{0}', space=vmem, size = 0x8000, scoped, tag = 'input window, operand 2']
    #allocation8 [shape = 'u8[1024]{0}', space=vmem, size = 0x400, scoped, tag = 'input window, operand 4']
    #allocation9 [shape = 's32[2]{0}', space=sflag, size = 0x8, scoped, tag = 'scoped memory for tpu_custom_call.1']
    #allocation10 [shape = 'u8[8192]{0}', space=vmem, size = 0x2000, scoped, tag = 'output window, operand 0']
    %10 = vsyncpa [#allocation3], 0
    %11 = vsyncpa [#allocation6], 0
    %s12 = scalar_lea.sflag [#allocation6], 1
    %13 = vsyncpa %s12, 0
    %14 = vsyncpa [#allocation9], 0
    %s15 = scalar_lea.sflag [#allocation9], 1
    %16 = vsyncpa %s15, 0
    %17 = vsyncpa [#allocation4], 0
    %s18 = scalar_lea.sflag [#allocation4], 1
    %19 = vsyncpa %s18, 0
    loop: start=0, step=1, limit=4
    $region2: #{tpu_custom_call.1} parent=1 // loop_pre_header
      _
    $region3: #{tpu_custom_call.1} parent=1 // loop_header
      %s21 = sphi 0, %s25
      %p22 = scmp.ge.s32.totalorder %s21, 4
      %s28 = sphi 0, %s40
      %s29 = sphi 0, %s36
      %s30 = sphi 0, %s28
      %s31 = sphi 0, %s29
      %s32 = sphi 0, %s30
      %s33 = sphi 0, %s31
      %s43 = sphi 0, %s45
      %s46 = sphi 0, %s43
      %s47 = sphi 0, %s46
      %s63 = sphi 0, %s47
      %s69 = sphi 0, %s71
      %s72 = sphi 0, %s69
      %s73 = sphi 0, %s72
      %s89 = sphi 0, %s73
      %s95 = sphi 0, %s97
      %s98 = sphi 0, %s95
      %s99 = sphi 0, %s98
      %s115 = sphi 0, %s99
      %s121 = sphi 0, %s123
      %s124 = sphi 0, %s121
      %s125 = sphi 0, %s124
      %s141 = sphi 0, %s125
      %s147 = sphi 0, %s149
      %s150 = sphi 0, %s147
      %s151 = sphi 0, %s150
      %s167 = sphi 0, %s151
      %s175 = sphi 0, %s177
      %s178 = sphi 0, %s175
      %s179 = sphi 0, %s178
      %s195 = sphi 0, %s179
    $region4: #{tpu_custom_call.1} parent=1 // loop_header_branch
      %24 = sbr.rel (%p22) target = $region8
    $region5: #{tpu_custom_call.1} parent=1 // loop_body
      %s26 = ssub.s32 %s21, 1
      %s27 = ssub.s32 %s21, 2
      %s34 = sadd.s32 1, %s29
      %p35 = scmp.ge.s32.totalorder %s34, 2
      %s36 = scalar_select %p35, 0, %s34
      %s37 = sadd.s32 1, %s28
      %s38 = scalar_select %p35, %s37, %s28
      %p39 = scmp.ge.s32.totalorder %s38, 1
      %s40 = scalar_select %p39, 0, %s38
      %s41 = ssub.s32 %s28, %s40
      %p42 = scmp.eq.s32.totalorder %s41, 0
      %s44 = sadd.s32 %s43, 1
      %s45 = scalar_select %p42, %s43, %s44
      %p48 = pneg %p42
      %p49 = scmp.eq.s32.totalorder %s21, 1
      %p50 = por %p48, %p49
      %p51 = scmp.ne.s32.totalorder %s43, %s46
      %p52 = scmp.eq.s32.totalorder %s21, 0
      %p53 = por %p51, %p52
      %p54 = scmp.ne.s32.totalorder %s43, %s46
      %p55 = scmp.eq.s32.totalorder %s26, 1
      %p56 = por %p54, %p55
      %p57 = scmp.ne.s32.totalorder %s46, %s47
      %p58 = scmp.eq.s32.totalorder %s26, 0
      %p59 = por %p57, %p58
      %p60 = scmp.ne.s32.totalorder %s46, %s47
      %p61 = scmp.eq.s32.totalorder %s27, 1
      %p62 = por %p60, %p61
      %p64 = scmp.ne.s32.totalorder %s47, %s63
      %p65 = scmp.eq.s32.totalorder %s27, 0
      %p66 = por %p64, %p65
      %s67 = ssub.s32 %s29, %s36
      %p68 = scmp.eq.s32.totalorder %s67, 0
      %s70 = sadd.s32 %s69, 1
      %s71 = scalar_select %p68, %s69, %s70
      %p74 = pneg %p68
      %p75 = scmp.eq.s32.totalorder %s21, 1
      %p76 = por %p74, %p75
      %p77 = scmp.ne.s32.totalorder %s69, %s72
      %p78 = scmp.eq.s32.totalorder %s21, 0
      %p79 = por %p77, %p78
      %p80 = scmp.ne.s32.totalorder %s69, %s72
      %p81 = scmp.eq.s32.totalorder %s26, 1
      %p82 = por %p80, %p81
      %p83 = scmp.ne.s32.totalorder %s72, %s73
      %p84 = scmp.eq.s32.totalorder %s26, 0
      %p85 = por %p83, %p84
      %p86 = scmp.ne.s32.totalorder %s72, %s73
      %p87 = scmp.eq.s32.totalorder %s27, 1
      %p88 = por %p86, %p87
      %p90 = scmp.ne.s32.totalorder %s73, %s89
      %p91 = scmp.eq.s32.totalorder %s27, 0
      %p92 = por %p90, %p91
      %s93 = ssub.s32 %s29, %s36
      %p94 = scmp.eq.s32.totalorder %s93, 0
      %s96 = sadd.s32 %s95, 1
      %s97 = scalar_select %p94, %s95, %s96
      %p100 = pneg %p94
      %p101 = scmp.eq.s32.totalorder %s21, 1
      %p102 = por %p100, %p101
      %p103 = scmp.ne.s32.totalorder %s95, %s98
      %p104 = scmp.eq.s32.totalorder %s21, 0
      %p105 = por %p103, %p104
      %p106 = scmp.ne.s32.totalorder %s95, %s98
      %p107 = scmp.eq.s32.totalorder %s26, 1
      %p108 = por %p106, %p107
      %p109 = scmp.ne.s32.totalorder %s98, %s99
      %p110 = scmp.eq.s32.totalorder %s26, 0
      %p111 = por %p109, %p110
      %p112 = scmp.ne.s32.totalorder %s98, %s99
      %p113 = scmp.eq.s32.totalorder %s27, 1
      %p114 = por %p112, %p113
      %p116 = scmp.ne.s32.totalorder %s99, %s115
      %p117 = scmp.eq.s32.totalorder %s27, 0
      %p118 = por %p116, %p117
      %s119 = ssub.s32 %s29, %s36
      %p120 = scmp.eq.s32.totalorder %s119, 0
      %s122 = sadd.s32 %s121, 1
      %s123 = scalar_select %p120, %s121, %s122
      %p126 = pneg %p120
      %p127 = scmp.eq.s32.totalorder %s21, 1
      %p128 = por %p126, %p127
      %p129 = scmp.ne.s32.totalorder %s121, %s124
      %p130 = scmp.eq.s32.totalorder %s21, 0
      %p131 = por %p129, %p130
      %p132 = scmp.ne.s32.totalorder %s121, %s124
      %p133 = scmp.eq.s32.totalorder %s26, 1
      %p134 = por %p132, %p133
      %p135 = scmp.ne.s32.totalorder %s124, %s125
      %p136 = scmp.eq.s32.totalorder %s26, 0
      %p137 = por %p135, %p136
      %p138 = scmp.ne.s32.totalorder %s124, %s125
      %p139 = scmp.eq.s32.totalorder %s27, 1
      %p140 = por %p138, %p139
      %p142 = scmp.ne.s32.totalorder %s125, %s141
      %p143 = scmp.eq.s32.totalorder %s27, 0
      %p144 = por %p142, %p143
      %s145 = ssub.s32 %s29, %s36
      %p146 = scmp.eq.s32.totalorder %s145, 0
      %s148 = sadd.s32 %s147, 1
      %s149 = scalar_select %p146, %s147, %s148
      %p152 = pneg %p146
      %p153 = scmp.eq.s32.totalorder %s21, 1
      %p154 = por %p152, %p153
      %p155 = scmp.ne.s32.totalorder %s147, %s150
      %p156 = scmp.eq.s32.totalorder %s21, 0
      %p157 = por %p155, %p156
      %p158 = scmp.ne.s32.totalorder %s147, %s150
      %p159 = scmp.eq.s32.totalorder %s26, 1
      %p160 = por %p158, %p159
      %p161 = scmp.ne.s32.totalorder %s150, %s151
      %p162 = scmp.eq.s32.totalorder %s26, 0
      %p163 = por %p161, %p162
      %p164 = scmp.ne.s32.totalorder %s150, %s151
      %p165 = scmp.eq.s32.totalorder %s27, 1
      %p166 = por %p164, %p165
      %p168 = scmp.ne.s32.totalorder %s151, %s167
      %p169 = scmp.eq.s32.totalorder %s27, 0
      %p170 = por %p168, %p169
      %s171 = ssub.s32 %s28, %s40
      %s172 = ssub.s32 %s29, %s36
      %s173 = sor.u32 %s171, %s172
      %p174 = scmp.eq.s32.totalorder %s173, 0
      %s176 = sadd.s32 %s175, 1
      %s177 = scalar_select %p174, %s175, %s176
      %p180 = pneg %p174
      %p181 = scmp.eq.s32.totalorder %s21, 1
      %p182 = por %p180, %p181
      %p183 = scmp.ne.s32.totalorder %s175, %s178
      %p184 = scmp.eq.s32.totalorder %s21, 0
      %p185 = por %p183, %p184
      %p186 = scmp.ne.s32.totalorder %s175, %s178
      %p187 = scmp.eq.s32.totalorder %s26, 1
      %p188 = por %p186, %p187
      %p189 = scmp.ne.s32.totalorder %s178, %s179
      %p190 = scmp.eq.s32.totalorder %s26, 0
      %p191 = por %p189, %p190
      %p192 = scmp.ne.s32.totalorder %s178, %s179
      %p193 = scmp.eq.s32.totalorder %s27, 1
      %p194 = por %p192, %p193
      %p196 = scmp.ne.s32.totalorder %s179, %s195
      %p197 = scmp.eq.s32.totalorder %s27, 0
      %p198 = por %p196, %p197
      %p199 = scmp.le.s32.totalorder 1, %s21
      %p200 = scmp.lt.s32.totalorder %s21, 3
      %p201 = pnand %p199, %p200
      %p202 = pneg %p201
      // Predicated region
      $region9: #{tpu_custom_call.1} parent=5 // pred_check
        _
      $region10: #{tpu_custom_call.1} parent=5 // pred_check_branch
        %204 = sbr.rel (%p201) target = $region12
      $region11: #{tpu_custom_call.1} parent=5 // pred_region
        %s205 = ssub.s32 %s21, 1
        // Predicated region
        $region13: #{tpu_custom_call.1} parent=11 // pred_check
          %p206 = pneg %p59
        $region14: #{tpu_custom_call.1} parent=11 // pred_check_branch
          %208 = sbr.rel (%p206) target = $region16
        $region15: #{tpu_custom_call.1} parent=11 // pred_region
          %210 = vsyncadd [#allocation3], 0
          %s211 = smul.addr %s30, 8
          %s212 = scalar_lea.hbm %s0, %s211
          %s214 = sshll.u32 %s212, 4
          %s215 = int_to_ptr.hbm [resolvable:$true] %s214
          %s216 = sshll.u32 [#allocation2], 4
          %s217 = int_to_ptr.vmem [resolvable:$true] %s216
          %219 = dma.hbm_to_vmem [thread:$0]  %s215, 128, %s217, [#allocation3]
        $region16: #{tpu_custom_call.1} parent=11 // pred_fallthru
          _
      $region12: #{tpu_custom_call.1} parent=5 // pred_fallthru
        _
      %p220 = scmp.lt.s32.totalorder %s21, 2
      // Predicated region
      $region17: #{tpu_custom_call.1} parent=5 // pred_check
        %p221 = pneg %p220
      $region18: #{tpu_custom_call.1} parent=5 // pred_check_branch
        %223 = sbr.rel (%p221) target = $region20
      $region19: #{tpu_custom_call.1} parent=5 // pred_region
        // Predicated region
        $region21: #{tpu_custom_call.1} parent=19 // pred_check
          %p224 = pneg %p79
        $region22: #{tpu_custom_call.1} parent=19 // pred_check_branch
          %226 = sbr.rel (%p224) target = $region24
        $region23: #{tpu_custom_call.1} parent=19 // pred_region
          %s227 = sand.u32 %s21, 1
          %s228 = scalar_lea.sflag [#allocation6], %s227
          %s229 = sand.u32 %s69, 1
          %s230 = smul.addr %s229, 32
          %s231 = scalar_lea.vmem [#allocation5], %s230
          %233 = vsyncadd %s228, 0
          %s234 = smul.addr %s29, 8
          %s235 = scalar_lea.hbm %s1, %s234
          %s236 = sshll.u32 %s235, 4
          %s237 = int_to_ptr.hbm [resolvable:$true] %s236
          %s238 = sshll.u32 %s231, 4
          %s239 = int_to_ptr.vmem [resolvable:$true] %s238
          %244 = dma.hbm_to_vmem [thread:$0]  %s237, 512, %s239, %s228, 256, 128, 8
        $region24: #{tpu_custom_call.1} parent=19 // pred_fallthru
          _
        // Predicated region
        $region25: #{tpu_custom_call.1} parent=19 // pred_check
          %p245 = pneg %p105
        $region26: #{tpu_custom_call.1} parent=19 // pred_check_branch
          %247 = sbr.rel (%p245) target = $region28
        $region27: #{tpu_custom_call.1} parent=19 // pred_region
          %s248 = sand.u32 %s21, 1
          %s249 = scalar_lea.sflag [#allocation6], %s248
          %s250 = sand.u32 %s95, 1
          %s251 = smul.addr %s250, 32
          %s252 = scalar_lea.vmem [#allocation7], %s251
          %254 = vsyncadd %s249, 0
          %s255 = smul.addr %s29, 8
          %s256 = scalar_lea.hbm %s2, %s255
          %s257 = sshll.u32 %s256, 4
          %s258 = int_to_ptr.hbm [resolvable:$true] %s257
          %s259 = sshll.u32 %s252, 4
          %s260 = int_to_ptr.vmem [resolvable:$true] %s259
          %265 = dma.hbm_to_vmem [thread:$0]  %s258, 512, %s260, %s249, 256, 128, 8
        $region28: #{tpu_custom_call.1} parent=19 // pred_fallthru
          _
        // Predicated region
        $region29: #{tpu_custom_call.1} parent=19 // pred_check
          %p266 = pneg %p131
        $region30: #{tpu_custom_call.1} parent=19 // pred_check_branch
          %268 = sbr.rel (%p266) target = $region32
        $region31: #{tpu_custom_call.1} parent=19 // pred_region
          %p269 = scmp.lt.s32.totalorder %s29, 1
          %s270 = scalar_select %p269, %s29, 1
          %s271 = scalar_lea.vmem %s3, %s270
        $region32: #{tpu_custom_call.1} parent=19 // pred_fallthru
          _
        // Predicated region
        $region33: #{tpu_custom_call.1} parent=19 // pred_check
          %p272 = pneg %p157
        $region34: #{tpu_custom_call.1} parent=19 // pred_check_branch
          %274 = sbr.rel (%p272) target = $region36
        $region35: #{tpu_custom_call.1} parent=19 // pred_region
          %s275 = sand.u32 %s147, 1
          %s276 = scalar_lea.sflag [#allocation9], %s275
          %s277 = sand.u32 %s147, 1
          %s278 = scalar_lea.vmem [#allocation8], %s277
          %280 = vsyncadd %s276, 0
          %s281 = scalar_lea.hbm %s4, %s29
          %s283 = sshll.u32 %s281, 4
          %s284 = int_to_ptr.hbm [resolvable:$true] %s283
          %s285 = sshll.u32 %s278, 4
          %s286 = int_to_ptr.vmem [resolvable:$true] %s285
          %288 = dma.hbm_to_vmem [thread:$0]  %s284, 16, %s286, %s276
        $region36: #{tpu_custom_call.1} parent=19 // pred_fallthru
          _
      $region20: #{tpu_custom_call.1} parent=5 // pred_fallthru
        _
      %p289 = scmp.le.s32.totalorder 1, %s21
      %p290 = scmp.lt.s32.totalorder %s21, 3
      %p291 = pnand %p289, %p290
      %p292 = pneg %p291
      // Predicated region
      $region37: #{tpu_custom_call.1} parent=5 // pred_check
        _
      $region38: #{tpu_custom_call.1} parent=5 // pred_check_branch
        %294 = sbr.rel (%p291) target = $region40
      $region39: #{tpu_custom_call.1} parent=5 // pred_region
        %s295 = ssub.s32 %s21, 1
        // Predicated region
        $region41: #{tpu_custom_call.1} parent=39 // pred_check
          %p296 = pneg %p59
        $region42: #{tpu_custom_call.1} parent=39 // pred_check_branch
          %298 = sbr.rel (%p296) target = $region44
        $region43: #{tpu_custom_call.1} parent=39 // pred_region
          %300 = dma.done [#allocation3], 128
        $region44: #{tpu_custom_call.1} parent=39 // pred_fallthru
          _
        %s301 = sand.u32 %s26, 1
        %s302 = scalar_lea.sflag [#allocation6], %s301
        %s303 = sand.u32 %s72, 1
        %s304 = smul.addr %s303, 32
        %s305 = scalar_lea.vmem [#allocation5], %s304
        // Predicated region
        $region45: #{tpu_custom_call.1} parent=39 // pred_check
          %p306 = pneg %p85
        $region46: #{tpu_custom_call.1} parent=39 // pred_check_branch
          %308 = sbr.rel (%p306) target = $region48
        $region47: #{tpu_custom_call.1} parent=39 // pred_region
          %310 = dma.done %s302, 512
        $region48: #{tpu_custom_call.1} parent=39 // pred_fallthru
          _
        %s311 = sand.u32 %s26, 1
        %s312 = scalar_lea.sflag [#allocation6], %s311
        %s313 = sand.u32 %s98, 1
        %s314 = smul.addr %s313, 32
        %s315 = scalar_lea.vmem [#allocation7], %s314
        // Predicated region
        $region49: #{tpu_custom_call.1} parent=39 // pred_check
          %p316 = pneg %p111
        $region50: #{tpu_custom_call.1} parent=39 // pred_check_branch
          %318 = sbr.rel (%p316) target = $region52
        $region51: #{tpu_custom_call.1} parent=39 // pred_region
          %320 = dma.done %s312, 512
        $region52: #{tpu_custom_call.1} parent=39 // pred_fallthru
          _
        %s321 = sand.u32 %s150, 1
        %s322 = scalar_lea.sflag [#allocation9], %s321
        %s323 = sand.u32 %s150, 1
        %s324 = scalar_lea.vmem [#allocation8], %s323
        // Predicated region
        $region53: #{tpu_custom_call.1} parent=39 // pred_check
          %p325 = pneg %p163
        $region54: #{tpu_custom_call.1} parent=39 // pred_check_branch
          %327 = sbr.rel (%p325) target = $region56
        $region55: #{tpu_custom_call.1} parent=39 // pred_region
          %329 = dma.done %s322, 16
        $region56: #{tpu_custom_call.1} parent=39 // pred_fallthru
          _
        %p330 = pneg %p59
        %p331 = pneg %p56
        %s332 = sand.u32 %s26, 1
        %s333 = scalar_lea.sflag [#allocation6], %s332
        %s334 = sand.u32 %s72, 1
        %s335 = smul.addr %s334, 32
        %s336 = scalar_lea.vmem [#allocation5], %s335
        %p337 = pneg %p85
        %p338 = pneg %p82
        %s339 = sand.u32 %s26, 1
        %s340 = scalar_lea.sflag [#allocation6], %s339
        %s341 = sand.u32 %s98, 1
        %s342 = smul.addr %s341, 32
        %s343 = scalar_lea.vmem [#allocation7], %s342
        %p344 = pneg %p111
        %p345 = pneg %p108
        %p346 = scmp.lt.s32.totalorder %s31, 1
        %s347 = scalar_select %p346, %s31, 1
        %s348 = scalar_lea.vmem %s3, %s347
        %p349 = pneg %p137
        %p350 = pneg %p134
        %s351 = sand.u32 %s150, 1
        %s352 = scalar_lea.sflag [#allocation9], %s351
        %s353 = sand.u32 %s150, 1
        %s354 = scalar_lea.vmem [#allocation8], %s353
        %p355 = pneg %p163
        %p356 = pneg %p160
        %p357 = pneg %p191
        %p358 = pneg %p188
        %s359 = sand.u32 %s178, 1
        %s360 = scalar_lea.sflag [#allocation4], %s359
        %s361 = sand.u32 %s178, 1
        %s362 = smul.addr %s361, 8
        %s363 = scalar_lea.vmem [#allocation10], %s362
        %p364 = scmp.lt.s32.totalorder %s31, 1
        %s365 = scalar_select %p364, %s31, 1
        %s366 = scalar_lea.vmem %s3, %s365
        %v367 = vld [vmem:[#allocation2] sm:$0xff]
        %v368 = vld [vmem:[%s305] sm:$0x1]
        %v369 = vld [vmem:[%s315] sm:$0x1]
        %371 = vset.pattern.permute.xlu0 0
        %372 = vperm.xlu0 %371, %v367
        %v373 = vpop.permute.xlu0 %372
        %v375 = vperm.slane %v369, 0
        %v376 = vmul.f32 %v373, %v375
        %v377 = vperm.slane %v368, 0
        %v378 = vadd.f32 %v377, %v376
        %v379 = vmax.f32 %v378, 0.0
        %v380 = vadd.f32 %v379, 1e-10
        %v381 = vld [vmem:[%s305 + $0x1] sm:$0x1]
        %v382 = vld [vmem:[%s315 + $0x1] sm:$0x1]
        %383 = vset.pattern.permute.xlu0 1
        %384 = vperm.xlu0 %383, %v367
        %v385 = vpop.permute.xlu0 %384
        %v387 = vperm.slane %v382, 0
        %v388 = vmul.f32 %v385, %v387
        %v389 = vperm.slane %v381, 0
        %v390 = vadd.f32 %v389, %v388
        %v391 = vmax.f32 %v390, 0.0
        %v392 = vadd.f32 %v391, 1e-10
        %v393 = vmul.f32 %v380, %v392
        %v394 = vld [vmem:[%s305 + $0x2] sm:$0x1]
        %v395 = vld [vmem:[%s315 + $0x2] sm:$0x1]
        %396 = vset.pattern.permute.xlu0 2
        %397 = vperm.xlu0 %396, %v367
        %v398 = vpop.permute.xlu0 %397
        %v400 = vperm.slane %v395, 0
        %v401 = vmul.f32 %v398, %v400
        %v402 = vperm.slane %v394, 0
        %v403 = vadd.f32 %v402, %v401
        %v404 = vmax.f32 %v403, 0.0
        %v405 = vadd.f32 %v404, 1e-10
        %v406 = vmul.f32 %v393, %v405
        %v407 = vlog2.pop %v406
        %v408 = vmul.f32 %v407, 0.6931472
        %v409 = vadd.f32 %v408, 0.0
        %v410 = vld [vmem:[%s305 + $0x3] sm:$0x1]
        %v411 = vld [vmem:[%s315 + $0x3] sm:$0x1]
        %412 = vset.pattern.permute.xlu0 3
        %413 = vperm.xlu0 %412, %v367
        %v414 = vpop.permute.xlu0 %413
        %v416 = vperm.slane %v411, 0
        %v417 = vmul.f32 %v414, %v416
        %v418 = vperm.slane %v410, 0
        %v419 = vadd.f32 %v418, %v417
        %v420 = vmax.f32 %v419, 0.0
        %v421 = vadd.f32 %v420, 1e-10
        %v422 = vld [vmem:[%s305 + $0x4] sm:$0x1]
        %v423 = vld [vmem:[%s315 + $0x4] sm:$0x1]
        %424 = vset.pattern.permute.xlu0 4
        %425 = vperm.xlu0 %424, %v367
        %v426 = vpop.permute.xlu0 %425
        %v428 = vperm.slane %v423, 0
        %v429 = vmul.f32 %v426, %v428
        %v430 = vperm.slane %v422, 0
        %v431 = vadd.f32 %v430, %v429
        %v432 = vmax.f32 %v431, 0.0
        %v433 = vadd.f32 %v432, 1e-10
        %v434 = vmul.f32 %v421, %v433
        %v435 = vld [vmem:[%s305 + $0x5] sm:$0x1]
        %v436 = vld [vmem:[%s315 + $0x5] sm:$0x1]
        %437 = vset.pattern.permute.xlu0 5
        %438 = vperm.xlu0 %437, %v367
        %v439 = vpop.permute.xlu0 %438
        %v441 = vperm.slane %v436, 0
        %v442 = vmul.f32 %v439, %v441
        %v443 = vperm.slane %v435, 0
        %v444 = vadd.f32 %v443, %v442
        %v445 = vmax.f32 %v444, 0.0
        %v446 = vadd.f32 %v445, 1e-10
        %v447 = vmul.f32 %v434, %v446
        %v448 = vlog2.pop %v447
        %v449 = vmul.f32 %v448, 0.6931472
        %v450 = vadd.f32 %v409, %v449
        %v451 = vld [vmem:[%s305 + $0x6] sm:$0x1]
        %v452 = vld [vmem:[%s315 + $0x6] sm:$0x1]
        %453 = vset.pattern.permute.xlu0 6
        %454 = vperm.xlu0 %453, %v367
        %v455 = vpop.permute.xlu0 %454
        %v457 = vperm.slane %v452, 0
        %v458 = vmul.f32 %v455, %v457
        %v459 = vperm.slane %v451, 0
        %v460 = vadd.f32 %v459, %v458
        %v461 = vmax.f32 %v460, 0.0
        %v462 = vadd.f32 %v461, 1e-10
        %v463 = vld [vmem:[%s305 + $0x7] sm:$0x1]
        %v464 = vld [vmem:[%s315 + $0x7] sm:$0x1]
        %465 = vset.pattern.permute.xlu0 7
        %466 = vperm.xlu0 %465, %v367
        %v467 = vpop.permute.xlu0 %466
        %v469 = vperm.slane %v464, 0
        %v470 = vmul.f32 %v467, %v469
        %v471 = vperm.slane %v463, 0
        %v472 = vadd.f32 %v471, %v470
        %v473 = vmax.f32 %v472, 0.0
        %v474 = vadd.f32 %v473, 1e-10
        %v475 = vmul.f32 %v462, %v474
        %v476 = vld [vmem:[%s305 + $0x8] sm:$0x1]
        %v477 = vld [vmem:[%s315 + $0x8] sm:$0x1]
        %478 = vset.pattern.permute.xlu0 8
        %479 = vperm.xlu0 %478, %v367
        %v480 = vpop.permute.xlu0 %479
        %v482 = vperm.slane %v477, 0
        %v483 = vmul.f32 %v480, %v482
        %v484 = vperm.slane %v476, 0
        %v485 = vadd.f32 %v484, %v483
        %v486 = vmax.f32 %v485, 0.0
        %v487 = vadd.f32 %v486, 1e-10
        %v488 = vmul.f32 %v475, %v487
        %v489 = vlog2.pop %v488
        %v490 = vmul.f32 %v489, 0.6931472
        %v491 = vadd.f32 %v450, %v490
        %v492 = vld [vmem:[%s305 + $0x9] sm:$0x1]
        %v493 = vld [vmem:[%s315 + $0x9] sm:$0x1]
        %494 = vset.pattern.permute.xlu0 9
        %495 = vperm.xlu0 %494, %v367
        %v496 = vpop.permute.xlu0 %495
        %v498 = vperm.slane %v493, 0
        %v499 = vmul.f32 %v496, %v498
        %v500 = vperm.slane %v492, 0
        %v501 = vadd.f32 %v500, %v499
        %v502 = vmax.f32 %v501, 0.0
        %v503 = vadd.f32 %v502, 1e-10
        %v504 = vld [vmem:[%s305 + $0xa] sm:$0x1]
        %v505 = vld [vmem:[%s315 + $0xa] sm:$0x1]
        %506 = vset.pattern.permute.xlu0 10
        %507 = vperm.xlu0 %506, %v367
        %v508 = vpop.permute.xlu0 %507
        %v510 = vperm.slane %v505, 0
        %v511 = vmul.f32 %v508, %v510
        %v512 = vperm.slane %v504, 0
        %v513 = vadd.f32 %v512, %v511
        %v514 = vmax.f32 %v513, 0.0
        %v515 = vadd.f32 %v514, 1e-10
        %v516 = vmul.f32 %v503, %v515
        %v517 = vld [vmem:[%s305 + $0xb] sm:$0x1]
        %v518 = vld [vmem:[%s315 + $0xb] sm:$0x1]
        %519 = vset.pattern.permute.xlu0 11
        %520 = vperm.xlu0 %519, %v367
        %v521 = vpop.permute.xlu0 %520
        %v523 = vperm.slane %v518, 0
        %v524 = vmul.f32 %v521, %v523
        %v525 = vperm.slane %v517, 0
        %v526 = vadd.f32 %v525, %v524
        %v527 = vmax.f32 %v526, 0.0
        %v528 = vadd.f32 %v527, 1e-10
        %v529 = vmul.f32 %v516, %v528
        %v530 = vlog2.pop %v529
        %v531 = vmul.f32 %v530, 0.6931472
        %v532 = vadd.f32 %v491, %v531
        %v533 = vld [vmem:[%s305 + $0xc] sm:$0x1]
        %v534 = vld [vmem:[%s315 + $0xc] sm:$0x1]
        %535 = vset.pattern.permute.xlu0 12
        %536 = vperm.xlu0 %535, %v367
        %v537 = vpop.permute.xlu0 %536
        %v539 = vperm.slane %v534, 0
        %v540 = vmul.f32 %v537, %v539
        %v541 = vperm.slane %v533, 0
        %v542 = vadd.f32 %v541, %v540
        %v543 = vmax.f32 %v542, 0.0
        %v544 = vadd.f32 %v543, 1e-10
        %v545 = vld [vmem:[%s305 + $0xd] sm:$0x1]
        %v546 = vld [vmem:[%s315 + $0xd] sm:$0x1]
        %547 = vset.pattern.permute.xlu0 13
        %548 = vperm.xlu0 %547, %v367
        %v549 = vpop.permute.xlu0 %548
        %v551 = vperm.slane %v546, 0
        %v552 = vmul.f32 %v549, %v551
        %v553 = vperm.slane %v545, 0
        %v554 = vadd.f32 %v553, %v552
        %v555 = vmax.f32 %v554, 0.0
        %v556 = vadd.f32 %v555, 1e-10
        %v557 = vmul.f32 %v544, %v556
        %v558 = vld [vmem:[%s305 + $0xe] sm:$0x1]
        %v559 = vld [vmem:[%s315 + $0xe] sm:$0x1]
        %560 = vset.pattern.permute.xlu0 14
        %561 = vperm.xlu0 %560, %v367
        %v562 = vpop.permute.xlu0 %561
        %v564 = vperm.slane %v559, 0
        %v565 = vmul.f32 %v562, %v564
        %v566 = vperm.slane %v558, 0
        %v567 = vadd.f32 %v566, %v565
        %v568 = vmax.f32 %v567, 0.0
        %v569 = vadd.f32 %v568, 1e-10
        %v570 = vmul.f32 %v557, %v569
        %v571 = vlog2.pop %v570
        %v572 = vmul.f32 %v571, 0.6931472
        %v573 = vadd.f32 %v532, %v572
        %v574 = vld [vmem:[%s305 + $0xf] sm:$0x1]
        %v575 = vld [vmem:[%s315 + $0xf] sm:$0x1]
        %576 = vset.pattern.permute.xlu0 15
        %577 = vperm.xlu0 %576, %v367
        %v578 = vpop.permute.xlu0 %577
        %v580 = vperm.slane %v575, 0
        %v581 = vmul.f32 %v578, %v580
        %v582 = vperm.slane %v574, 0
        %v583 = vadd.f32 %v582, %v581
        %v584 = vmax.f32 %v583, 0.0
        %v585 = vadd.f32 %v584, 1e-10
        %v586 = vld [vmem:[%s305 + $0x10] sm:$0x1]
        %v587 = vld [vmem:[%s315 + $0x10] sm:$0x1]
        %588 = vset.pattern.permute.xlu0 16
        %589 = vperm.xlu0 %588, %v367
        %v590 = vpop.permute.xlu0 %589
        %v592 = vperm.slane %v587, 0
        %v593 = vmul.f32 %v590, %v592
        %v594 = vperm.slane %v586, 0
        %v595 = vadd.f32 %v594, %v593
        %v596 = vmax.f32 %v595, 0.0
        %v597 = vadd.f32 %v596, 1e-10
        %v598 = vmul.f32 %v585, %v597
        %v599 = vld [vmem:[%s305 + $0x11] sm:$0x1]
        %v600 = vld [vmem:[%s315 + $0x11] sm:$0x1]
        %601 = vset.pattern.permute.xlu0 17
        %602 = vperm.xlu0 %601, %v367
        %v603 = vpop.permute.xlu0 %602
        %v605 = vperm.slane %v600, 0
        %v606 = vmul.f32 %v603, %v605
        %v607 = vperm.slane %v599, 0
        %v608 = vadd.f32 %v607, %v606
        %v609 = vmax.f32 %v608, 0.0
        %v610 = vadd.f32 %v609, 1e-10
        %v611 = vmul.f32 %v598, %v610
        %v612 = vlog2.pop %v611
        %v613 = vmul.f32 %v612, 0.6931472
        %v614 = vadd.f32 %v573, %v613
        %v615 = vld [vmem:[%s305 + $0x12] sm:$0x1]
        %v616 = vld [vmem:[%s315 + $0x12] sm:$0x1]
        %617 = vset.pattern.permute.xlu0 18
        %618 = vperm.xlu0 %617, %v367
        %v619 = vpop.permute.xlu0 %618
        %v621 = vperm.slane %v616, 0
        %v622 = vmul.f32 %v619, %v621
        %v623 = vperm.slane %v615, 0
        %v624 = vadd.f32 %v623, %v622
        %v625 = vmax.f32 %v624, 0.0
        %v626 = vadd.f32 %v625, 1e-10
        %v627 = vld [vmem:[%s305 + $0x13] sm:$0x1]
        %v628 = vld [vmem:[%s315 + $0x13] sm:$0x1]
        %629 = vset.pattern.permute.xlu0 19
        %630 = vperm.xlu0 %629, %v367
        %v631 = vpop.permute.xlu0 %630
        %v633 = vperm.slane %v628, 0
        %v634 = vmul.f32 %v631, %v633
        %v635 = vperm.slane %v627, 0
        %v636 = vadd.f32 %v635, %v634
        %v637 = vmax.f32 %v636, 0.0
        %v638 = vadd.f32 %v637, 1e-10
        %v639 = vmul.f32 %v626, %v638
        %v640 = vld [vmem:[%s305 + $0x14] sm:$0x1]
        %v641 = vld [vmem:[%s315 + $0x14] sm:$0x1]
        %642 = vset.pattern.permute.xlu0 20
        %643 = vperm.xlu0 %642, %v367
        %v644 = vpop.permute.xlu0 %643
        %v646 = vperm.slane %v641, 0
        %v647 = vmul.f32 %v644, %v646
        %v648 = vperm.slane %v640, 0
        %v649 = vadd.f32 %v648, %v647
        %v650 = vmax.f32 %v649, 0.0
        %v651 = vadd.f32 %v650, 1e-10
        %v652 = vmul.f32 %v639, %v651
        %v653 = vlog2.pop %v652
        %v654 = vmul.f32 %v653, 0.6931472
        %v655 = vadd.f32 %v614, %v654
        %v656 = vld [vmem:[%s305 + $0x15] sm:$0x1]
        %v657 = vld [vmem:[%s315 + $0x15] sm:$0x1]
        %658 = vset.pattern.permute.xlu0 21
        %659 = vperm.xlu0 %658, %v367
        %v660 = vpop.permute.xlu0 %659
        %v662 = vperm.slane %v657, 0
        %v663 = vmul.f32 %v660, %v662
        %v664 = vperm.slane %v656, 0
        %v665 = vadd.f32 %v664, %v663
        %v666 = vmax.f32 %v665, 0.0
        %v667 = vadd.f32 %v666, 1e-10
        %v668 = vld [vmem:[%s305 + $0x16] sm:$0x1]
        %v669 = vld [vmem:[%s315 + $0x16] sm:$0x1]
        %670 = vset.pattern.permute.xlu0 22
        %671 = vperm.xlu0 %670, %v367
        %v672 = vpop.permute.xlu0 %671
        %v674 = vperm.slane %v669, 0
        %v675 = vmul.f32 %v672, %v674
        %v676 = vperm.slane %v668, 0
        %v677 = vadd.f32 %v676, %v675
        %v678 = vmax.f32 %v677, 0.0
        %v679 = vadd.f32 %v678, 1e-10
        %v680 = vmul.f32 %v667, %v679
        %v681 = vld [vmem:[%s305 + $0x17] sm:$0x1]
        %v682 = vld [vmem:[%s315 + $0x17] sm:$0x1]
        %683 = vset.pattern.permute.xlu0 23
        %684 = vperm.xlu0 %683, %v367
        %v685 = vpop.permute.xlu0 %684
        %v687 = vperm.slane %v682, 0
        %v688 = vmul.f32 %v685, %v687
        %v689 = vperm.slane %v681, 0
        %v690 = vadd.f32 %v689, %v688
        %v691 = vmax.f32 %v690, 0.0
        %v692 = vadd.f32 %v691, 1e-10
        %v693 = vmul.f32 %v680, %v692
        %v694 = vlog2.pop %v693
        %v695 = vmul.f32 %v694, 0.6931472
        %v696 = vadd.f32 %v655, %v695
        %v697 = vld [vmem:[%s305 + $0x18] sm:$0x1]
        %v698 = vld [vmem:[%s315 + $0x18] sm:$0x1]
        %699 = vset.pattern.permute.xlu0 24
        %700 = vperm.xlu0 %699, %v367
        %v701 = vpop.permute.xlu0 %700
        %v703 = vperm.slane %v698, 0
        %v704 = vmul.f32 %v701, %v703
        %v705 = vperm.slane %v697, 0
        %v706 = vadd.f32 %v705, %v704
        %v707 = vmax.f32 %v706, 0.0
        %v708 = vadd.f32 %v707, 1e-10
        %v709 = vld [vmem:[%s305 + $0x19] sm:$0x1]
        %v710 = vld [vmem:[%s315 + $0x19] sm:$0x1]
        %711 = vset.pattern.permute.xlu0 25
        %712 = vperm.xlu0 %711, %v367
        %v713 = vpop.permute.xlu0 %712
        %v715 = vperm.slane %v710, 0
        %v716 = vmul.f32 %v713, %v715
        %v717 = vperm.slane %v709, 0
        %v718 = vadd.f32 %v717, %v716
        %v719 = vmax.f32 %v718, 0.0
        %v720 = vadd.f32 %v719, 1e-10
        %v721 = vmul.f32 %v708, %v720
        %v722 = vld [vmem:[%s305 + $0x1a] sm:$0x1]
        %v723 = vld [vmem:[%s315 + $0x1a] sm:$0x1]
        %724 = vset.pattern.permute.xlu0 26
        %725 = vperm.xlu0 %724, %v367
        %v726 = vpop.permute.xlu0 %725
        %v728 = vperm.slane %v723, 0
        %v729 = vmul.f32 %v726, %v728
        %v730 = vperm.slane %v722, 0
        %v731 = vadd.f32 %v730, %v729
        %v732 = vmax.f32 %v731, 0.0
        %v733 = vadd.f32 %v732, 1e-10
        %v734 = vmul.f32 %v721, %v733
        %v735 = vlog2.pop %v734
        %v736 = vmul.f32 %v735, 0.6931472
        %v737 = vadd.f32 %v696, %v736
        %v738 = vld [vmem:[%s305 + $0x1b] sm:$0x1]
        %v739 = vld [vmem:[%s315 + $0x1b] sm:$0x1]
        %740 = vset.pattern.permute.xlu0 27
        %741 = vperm.xlu0 %740, %v367
        %v742 = vpop.permute.xlu0 %741
        %v744 = vperm.slane %v739, 0
        %v745 = vmul.f32 %v742, %v744
        %v746 = vperm.slane %v738, 0
        %v747 = vadd.f32 %v746, %v745
        %v748 = vmax.f32 %v747, 0.0
        %v749 = vadd.f32 %v748, 1e-10
        %v750 = vld [vmem:[%s305 + $0x1c] sm:$0x1]
        %v751 = vld [vmem:[%s315 + $0x1c] sm:$0x1]
        %752 = vset.pattern.permute.xlu0 28
        %753 = vperm.xlu0 %752, %v367
        %v754 = vpop.permute.xlu0 %753
        %v756 = vperm.slane %v751, 0
        %v757 = vmul.f32 %v754, %v756
        %v758 = vperm.slane %v750, 0
        %v759 = vadd.f32 %v758, %v757
        %v760 = vmax.f32 %v759, 0.0
        %v761 = vadd.f32 %v760, 1e-10
        %v762 = vmul.f32 %v749, %v761
        %v763 = vld [vmem:[%s305 + $0x1d] sm:$0x1]
        %v764 = vld [vmem:[%s315 + $0x1d] sm:$0x1]
        %765 = vset.pattern.permute.xlu0 29
        %766 = vperm.xlu0 %765, %v367
        %v767 = vpop.permute.xlu0 %766
        %v769 = vperm.slane %v764, 0
        %v770 = vmul.f32 %v767, %v769
        %v771 = vperm.slane %v763, 0
        %v772 = vadd.f32 %v771, %v770
        %v773 = vmax.f32 %v772, 0.0
        %v774 = vadd.f32 %v773, 1e-10
        %v775 = vmul.f32 %v762, %v774
        %v776 = vlog2.pop %v775
        %v777 = vmul.f32 %v776, 0.6931472
        %v778 = vadd.f32 %v737, %v777
        %v779 = vld [vmem:[%s305 + $0x1e] sm:$0x1]
        %v780 = vld [vmem:[%s315 + $0x1e] sm:$0x1]
        %781 = vset.pattern.permute.xlu0 30
        %782 = vperm.xlu0 %781, %v367
        %v783 = vpop.permute.xlu0 %782
        %v785 = vperm.slane %v780, 0
        %v786 = vmul.f32 %v783, %v785
        %v787 = vperm.slane %v779, 0
        %v788 = vadd.f32 %v787, %v786
        %v789 = vmax.f32 %v788, 0.0
        %v790 = vadd.f32 %v789, 1e-10
        %v791 = vld [vmem:[%s305 + $0x1f] sm:$0x1]
        %v792 = vld [vmem:[%s315 + $0x1f] sm:$0x1]
        %793 = vset.pattern.permute.xlu0 31
        %794 = vperm.xlu0 %793, %v367
        %v795 = vpop.permute.xlu0 %794
        %v797 = vperm.slane %v792, 0
        %v798 = vmul.f32 %v795, %v797
        %v799 = vperm.slane %v791, 0
        %v800 = vadd.f32 %v799, %v798
        %v801 = vmax.f32 %v800, 0.0
        %v802 = vadd.f32 %v801, 1e-10
        %v803 = vmul.f32 %v790, %v802
        %v804 = vlog2.pop %v803
        %v805 = vmul.f32 %v804, 0.6931472
        %v806 = vadd.f32 %v778, %v805
        %v807 = vsub.f32 %v806, 1.0
        %v808 = vrcp.pop %v807
        %v809 = vmul.f32 %v807, %v808
        %v810 = vsub.f32 1.0, %v809
        %v811 = vmul.f32 %v808, %v810
        %v812 = vadd.f32 %v808, %v811
        %vm813 = vweird.f32 %v807
        %vm814 = vweird.f32 %v808
        %vm815 = vmor %vm813, %vm814
        %v816 = vsel %vm815, %v808, %v812
        %v817 = vand.u32 2147483647, %v807
        %vm818 = vcmp.eq.f32.partialorder %v817, 8.507059e+37
        %v819 = vand.u32 %v807, 2147483648
        %v820 = vor.u32 1.1754944e-38, %v819
        %v821 = vsel %vm818, %v820, %v816
        %v822 = vsub.f32 0.0, %v821
        %v823 = vld [vmem:[%s366] sm:$0x1]
        %v824 = vld [vmem:[%s324] sm:$0x1]
        %v826 = vperm.slane %v824, 0
        %v828 = vmul.f32 %v826, %v822
        %v830 = vperm.slane %v823, 0
        %v832 = vadd.f32 %v830, %v828
        %833 = vst [vmem:[%s363] sm:$0xff] %v832
        %s834 = sand.u32 %s178, 1
        %s835 = scalar_lea.sflag [#allocation4], %s834
        %s836 = sand.u32 %s178, 1
        %s837 = smul.addr %s836, 8
        %s838 = scalar_lea.vmem [#allocation10], %s837
        // Predicated region
        $region57: #{tpu_custom_call.1} parent=39 // pred_check
          %p839 = pneg %p188
        $region58: #{tpu_custom_call.1} parent=39 // pred_check_branch
          %841 = sbr.rel (%p839) target = $region60
        $region59: #{tpu_custom_call.1} parent=39 // pred_region
          %843 = vsyncadd %s835, 0
          %s844 = smul.addr %s30, 2
          %s845 = sadd.s32 %s31, %s844
          %s846 = smul.addr %s845, 8
          %s847 = scalar_lea.hbm %s5, %s846
          %s849 = sshll.u32 %s838, 4
          %s850 = int_to_ptr.vmem [resolvable:$true] %s849
          %s851 = sshll.u32 %s847, 4
          %s852 = int_to_ptr.hbm [resolvable:$true] %s851
          %854 = dma.vmem_to_hbm [thread:$0]  %s850, 128, %s852, %s835
        $region60: #{tpu_custom_call.1} parent=39 // pred_fallthru
          _
      $region40: #{tpu_custom_call.1} parent=5 // pred_fallthru
        _
      %p855 = scmp.le.s32.totalorder 2, %s21
      // Predicated region
      $region61: #{tpu_custom_call.1} parent=5 // pred_check
        %p856 = pneg %p855
      $region62: #{tpu_custom_call.1} parent=5 // pred_check_branch
        %858 = sbr.rel (%p856) target = $region64
      $region63: #{tpu_custom_call.1} parent=5 // pred_region
        %s859 = ssub.s32 %s21, 2
        // Predicated region
        $region65: #{tpu_custom_call.1} parent=63 // pred_check
          %p860 = pneg %p194
        $region66: #{tpu_custom_call.1} parent=63 // pred_check_branch
          %862 = sbr.rel (%p860) target = $region68
        $region67: #{tpu_custom_call.1} parent=63 // pred_region
          %s863 = sand.u32 %s179, 1
          %s864 = scalar_lea.sflag [#allocation4], %s863
          %s865 = sand.u32 %s179, 1
          %s866 = smul.addr %s865, 8
          %s867 = scalar_lea.vmem [#allocation10], %s866
          %869 = dma.done %s864, 128
        $region68: #{tpu_custom_call.1} parent=63 // pred_fallthru
          _
      $region64: #{tpu_custom_call.1} parent=5 // pred_fallthru
        _
    $region6: #{tpu_custom_call.1} parent=1 // loop_footer
      %s25 = sadd.s32 1, %s21
    $region7: #{tpu_custom_call.1} parent=1 // loop_footer_branch
      %20 = sbr.rel target = $region3
    $region8: #{tpu_custom_call.1} parent=1 // loop_exit
      _
    %870 = vsyncpa [#allocation3], 1
    %s871 = scalar_lea.sflag [#allocation3], 1
    %872 = vsyncpa %s871, 1
    %873 = vsyncpa [#allocation6], 1
    %s874 = scalar_lea.sflag [#allocation6], 1
    %875 = vsyncpa %s874, 1
    %876 = vsyncpa [#allocation9], 1
    %s877 = scalar_lea.sflag [#allocation9], 1
    %878 = vsyncpa %s877, 1
    %879 = vsyncpa [#allocation4], 1
    %s880 = scalar_lea.sflag [#allocation4], 1
    %881 = vsyncpa %s880, 1

</llo_original>
